<compile_context>
chip_gen: v5e
topology: v5e:2x2
jax: 0.10.0
libtpu: 0.0.40
codegen_flags: <defaults>
</compile_context>

<pallas_src>
import numpy as np
import jax
import jax.numpy as jnp
from jax.experimental import pallas as pl
from jax.experimental.pallas import tpu as pltpu


# ------------------------------------------------------------------ config ---
ENC_NUM_LAYER = 2
CODE_RATE_K = 1          # inputs.unsqueeze(dim=2) implies a single input channel
ENC_NUM_UNIT = 32
ENC_KERNEL_SIZE = 5      # odd -> padding = kernel_size // 2 keeps length L
BATCH = 2
BLOCK_LEN = 16


# ------------------------------------------------------------------ kernel ---
def make_kernel(*, seq_len, num_layer, kernel_size, mm_dtype):
    pad = kernel_size // 2

    def elu(v):
        # F.elu, alpha = 1.0.  exp(x) - 1 instead of expm1: guaranteed Mosaic
        # lowering; absolute error near 0 is ~1 ulp of 1.0, far below tolerance.
        return jnp.where(v > 0, v, jnp.exp(jnp.minimum(v, 0.0)) - 1.0)

    def kernel(x_ref, *refs):
        out_ref = refs[-1]
        conv_refs = refs[:2 * num_layer]
        wl_ref, bl_ref = refs[2 * num_layer], refs[2 * num_layer + 1]

        N = x_ref.shape[1]                              # B*L positions on lanes

        # Hoisted once: within-sequence lane index and per-tap validity masks,
        # pre-broadcast to each fused channel width (broadcast_in_dim is not
        # CSE'd by JAX, so do it once and reuse across layers/taps).
        lane_idx = jax.lax.broadcasted_iota(jnp.int32, (1, N), 1) % seq_len
        base_masks = [
            jnp.logical_and(lane_idx + (k - pad) >= 0,
                            lane_idx + (k - pad) < seq_len)
            for k in range(kernel_size)
        ]
        masks_cache = {}

        def masks_for(width):
            if width not in masks_cache:
                masks_cache[width] = [jnp.broadcast_to(m, (width, N))
                                      for m in base_masks]
            return masks_cache[width]

        def conv1d_same(h, w_ref, b_ref):
            # h: (Cin_f, N) f32; w_ref: (K, Cout_f, Cin_f) mm_dtype block-diag
            # fused; b_ref: (Cout_f, 1) f32.  K per-tap dots accumulated in f32
            # (no lane-axis im2col concat -> no vreg relayout copies).
            masks = masks_for(h.shape[0])
            acc = None
            for k in range(kernel_size):
                o = k - pad
                if o == 0:
                    xs = h
                else:
                    # xs[:, n] = h[:, n + o]; positions whose source would cross
                    # a sequence boundary (or wrap around the flattened batch)
                    # are zeroed by the mask ("same" zero padding).
                    xs = pltpu.roll(h, shift=(-o) % N, axis=1)
                    xs = jnp.where(masks[k], xs, 0.0)
                d = jnp.dot(w_ref[k], xs.astype(mm_dtype),
                            preferred_element_type=jnp.float32)
                acc = d if acc is None else acc + d
            return acc + b_ref[...]

        h = x_ref[...]                                  # (2, N) fused streams
        for i in range(num_layer):
            h = elu(conv1d_same(h, conv_refs[2 * i], conv_refs[2 * i + 1]))

        # Fused enc_linear_1 / enc_linear_2 via block-diagonal (2, 2C) weight.
        y = elu(jnp.dot(wl_ref[...], h.astype(mm_dtype),
                        preferred_element_type=jnp.float32) + bl_ref[...])

        # power_constraint: torch.mean / torch.std (unbiased) over the whole
        # tensor, single pass (sum + sumsq), rsqrt instead of two divides.
        n = 2.0 * N
        s1 = jnp.sum(y)
        s2 = jnp.sum(y * y)
        mean = s1 / n
        var = (s2 - n * mean * mean) / (n - 1.0)
        inv_std = jax.lax.rsqrt(var)                    # EUP
        out_ref[...] = (y - mean) * inv_std             # single lane-dense store

    return kernel


def _full_spec(a):
    nd = a.ndim
    return pl.BlockSpec(a.shape, lambda i: (0,) * nd)


# ---------------------------------------------------- block-diagonal packing ---
def pack_fused_params(params, *, num_layer, mm_dtype):
    """Fuse the two branches' weights block-diagonally, in the transposed
    (Cout, Cin) orientation used by the kernel; matmul weights cast to mm_dtype."""
    b1, b2 = params["b1"], params["b2"]
    flat = []
    for i in range(num_layer):
        w1 = jnp.transpose(b1["conv_w"][i], (0, 2, 1))   # (K, Cout, Cin)
        w2 = jnp.transpose(b2["conv_w"][i], (0, 2, 1))
        K, cout, cin = w1.shape
        w = jnp.zeros((K, 2 * cout, 2 * cin), jnp.float32)
        w = w.at[:, :cout, :cin].set(w1)
        w = w.at[:, cout:, cin:].set(w2)
        flat.append(w.astype(mm_dtype))                  # (K, 2Cout, 2Cin)
        b = jnp.concatenate([b1["conv_b"][i].reshape(cout, 1),
                             b2["conv_b"][i].reshape(cout, 1)], axis=0)
        flat.append(b)                                   # (2Cout, 1), f32
    c = b1["lin_w"].shape[0]
    wl = jnp.zeros((2, 2 * c), jnp.float32)
    wl = wl.at[0, :c].set(b1["lin_w"][:, 0])
    wl = wl.at[1, c:].set(b2["lin_w"][:, 0])
    flat.append(wl.astype(mm_dtype))                     # (2, 2C)
    bl = jnp.concatenate([b1["lin_b"].reshape(1, 1),
                          b2["lin_b"].reshape(1, 1)], axis=0)
    flat.append(bl)                                      # (2, 1), f32
    return flat


# ----------------------------------------------------------------- wrapper ---
def enc_cnn_turbo_forward(inputs, params, perm, *, num_layer=ENC_NUM_LAYER,
                          kernel_size=ENC_KERNEL_SIZE, mm_dtype=jnp.bfloat16):
    B, L = inputs.shape
    x = inputs.astype(jnp.float32)                  # channel dim (=1) is implicit
    # TODO(synk): at production B*L, fuse this gather into the kernel via scalar
    # prefetch instead of materializing the interleaved copy in HBM.
    x_int = x[:, perm]                              # interleaver.interleave (fixed perm)
    N = B * L

    # Fused, transposed two-row input: row 0 = systematic stream, row 1 =
    # interleaved stream; sequence positions on the lane axis.
    x_fused = jnp.stack([x.reshape(N), x_int.reshape(N)], axis=0)   # (2, N)

    flat = [x_fused] + pack_fused_params(params, num_layer=num_layer,
                                         mm_dtype=mm_dtype)

    # Rough advisory cost estimate so XLA schedules around the custom call.
    cin0 = 2 * params["b1"]["conv_w"][0].shape[1]
    chid = 2 * params["b1"]["conv_w"][0].shape[2]
    flops = 2 * N * kernel_size * chid * cin0
    if num_layer > 1:
        flops += 2 * N * kernel_size * chid * chid * (num_layer - 1)
    flops += 2 * N * 2 * chid
    transcendentals = N * (num_layer * chid + 2)
    bytes_accessed = (sum(int(np.prod(a.shape)) * a.dtype.itemsize for a in flat)
                      + N * 2 * 4)

    kernel = make_kernel(seq_len=L, num_layer=num_layer,
                         kernel_size=kernel_size, mm_dtype=mm_dtype)
    out = pl.pallas_call(
        kernel,
        out_shape=jax.ShapeDtypeStruct((2, N), jnp.float32),
        grid=(1,),
        in_specs=[_full_spec(a) for a in flat],
        out_specs=pl.BlockSpec((2, N), lambda i: (0, 0)),
        compiler_params=pltpu.CompilerParams(
            dimension_semantics=("arbitrary",),
            vmem_limit_bytes=32 * 1024 * 1024),
        cost_estimate=pl.CostEstimate(flops=int(flops),
                                      transcendentals=int(transcendentals),
                                      bytes_accessed=int(bytes_accessed)),
    )(*flat)
    return out.T.reshape(B, L, 2)                   # cat dim=2; squeeze(2) is a no-op


# ------------------------------------------------------------------ params ---
def init_params(key, *, code_rate_k, enc_num_unit, enc_kernel_size, enc_num_layer):
    params = {}
    for br, bk in zip(("b1", "b2"), jax.random.split(key, 2)):
        ks = jax.random.split(bk, 2 * enc_num_layer + 2)
        conv_w, conv_b = [], []
        for i in range(enc_num_layer):
            cin = code_rate_k if i == 0 else enc_num_unit
            conv_w.append(0.1 * jax.random.normal(
                ks[2 * i], (enc_kernel_size, cin, enc_num_unit), jnp.float32))
            conv_b.append(0.1 * jax.random.normal(
                ks[2 * i + 1], (1, enc_num_unit), jnp.float32))
        lin_w = 0.1 * jax.random.normal(ks[-2], (enc_num_unit, 1), jnp.float32)
        lin_b = 0.1 * jax.random.normal(ks[-1], (1, 1), jnp.float32)
        params[br] = {"conv_w": conv_w, "conv_b": conv_b,
                      "lin_w": lin_w, "lin_b": lin_b}
    return params


# -------------------------------------------------------- pure-JAX reference ---
def reference_forward(inputs, params, perm, *, num_layer=ENC_NUM_LAYER):
    x = inputs.astype(jnp.float32)[:, :, None]      # (B, L, 1)

    def enc_block(xin, p):
        h = jnp.transpose(xin, (0, 2, 1))           # (B, C, L) like torch.transpose(1,2)
        for i in range(num_layer):
            w = jnp.transpose(p["conv_w"][i], (2, 1, 0))   # (Cout, Cin, K)
            pad = w.shape[2] // 2
            h = jax.lax.conv_general_dilated(
                h, w, window_strides=(1,), padding=[(pad, pad)],
                dimension_numbers=("NCH", "OIH", "NCH"))
            h = h + p["conv_b"][i][0][None, :, None]
            h = jax.nn.elu(h)
        return jnp.transpose(h, (0, 2, 1))

    x_sys = enc_block(x, params["b1"])
    x_sys = jax.nn.elu(x_sys @ params["b1"]["lin_w"] + params["b1"]["lin_b"][0])
    x_p1 = enc_block(x[:, perm, :], params["b2"])
    x_p1 = jax.nn.elu(x_p1 @ params["b2"]["lin_w"] + params["b2"]["lin_b"][0])
    x_tx = jnp.concatenate([x_sys, x_p1], axis=2)
    mean = jnp.mean(x_tx)
    std = jnp.std(x_tx, ddof=1)                     # torch.std default: unbiased
    return (x_tx - mean) / std


# -------------------------------------------------------------------- main ---
if __name__ == "__main__":
    key = jax.random.PRNGKey(0)
    k_in, k_perm, k_par = jax.random.split(key, 3)

    # binary message bits, as the Turbo encoder expects
    inputs = jax.random.bernoulli(k_in, 0.5, (BATCH, BLOCK_LEN)).astype(jnp.float32)
    # deterministic interleaver permutation over the sequence dimension
    perm = jax.random.permutation(k_perm, BLOCK_LEN)
    params = init_params(
        k_par,
        code_rate_k=CODE_RATE_K,
        enc_num_unit=ENC_NUM_UNIT,
        enc_kernel_size=ENC_KERNEL_SIZE,
        enc_num_layer=ENC_NUM_LAYER,
    )

    ref = jax.block_until_ready(reference_forward(inputs, params, perm))

    # f32-matmul path: tight check of the fused / transposed / rolled pipeline.
    codes_f32 = jax.block_until_ready(
        enc_cnn_turbo_forward(inputs, params, perm, mm_dtype=jnp.float32))
    assert codes_f32.shape == (BATCH, BLOCK_LEN, 2)
    np.testing.assert_allclose(np.asarray(codes_f32), np.asarray(ref),
                               rtol=1e-4, atol=1e-4)

    # Default bf16-matmul path (MXU-friendly operands, f32 accumulation);
    # looser tolerance accounts for bf16 weight/activation rounding (~1e-2).
    codes = jax.block_until_ready(enc_cnn_turbo_forward(inputs, params, perm))
    assert codes.shape == (BATCH, BLOCK_LEN, 2)
    np.testing.assert_allclose(np.asarray(codes), np.asarray(ref),
                               rtol=5e-2, atol=5e-2)
    print("KERNEL_OK")
</pallas_src>

<mosaic_0001>
module attributes {stable_mosaic.version = 11 : i64} {
  func.func @kernel(%arg0: i32, %arg1: memref<2x32xf32, #tpu.memory_space<vmem>>, %arg2: memref<5x64x2xf32, #tpu.memory_space<vmem>>, %arg3: memref<64x1xf32, #tpu.memory_space<vmem>>, %arg4: memref<5x64x64xf32, #tpu.memory_space<vmem>>, %arg5: memref<64x1xf32, #tpu.memory_space<vmem>>, %arg6: memref<2x64xf32, #tpu.memory_space<vmem>>, %arg7: memref<2x1xf32, #tpu.memory_space<vmem>>, %arg8: memref<2x32xf32, #tpu.memory_space<vmem>>) attributes {dimension_semantics = [#tpu.dimension_semantics<arbitrary>], iteration_bounds = array<i64: 1>, scalar_prefetch = 0 : i64, scratch_operands = 0 : i64, tpu.core_type = #tpu.core_type<tc>, window_params = [{pipeline_mode = #tpu.pipeline_mode<synchronous>, transform_indices = @transform_0, window_bounds = array<i64: 2, 32>}, {pipeline_mode = #tpu.pipeline_mode<synchronous>, transform_indices = @transform_1, window_bounds = array<i64: 5, 64, 2>}, {pipeline_mode = #tpu.pipeline_mode<synchronous>, transform_indices = @transform_2, window_bounds = array<i64: 64, 1>}, {pipeline_mode = #tpu.pipeline_mode<synchronous>, transform_indices = @transform_3, window_bounds = array<i64: 5, 64, 64>}, {pipeline_mode = #tpu.pipeline_mode<synchronous>, transform_indices = @transform_4, window_bounds = array<i64: 64, 1>}, {pipeline_mode = #tpu.pipeline_mode<synchronous>, transform_indices = @transform_5, window_bounds = array<i64: 2, 64>}, {pipeline_mode = #tpu.pipeline_mode<synchronous>, transform_indices = @transform_6, window_bounds = array<i64: 2, 1>}, {pipeline_mode = #tpu.pipeline_mode<synchronous>, transform_indices = @transform_7, window_bounds = array<i64: 2, 32>}]} {
    %0 = tpu.iota {dimensions = array<i32: 1>} : vector<1x32xi32>
    %c16_i32 = arith.constant 16 : i32
    %c0_i32 = arith.constant 0 : i32
    %1 = arith.cmpi eq, %c16_i32, %c0_i32 : i32
    %c1_i32 = arith.constant 1 : i32
    %2 = arith.select %1, %c1_i32, %c16_i32 : i32
    %3 = vector.broadcast %2 : i32 to vector<1x32xi32>
    %4 = arith.remsi %0, %3 : vector<1x32xi32>
    %c0_i32_0 = arith.constant 0 : i32
    %5 = vector.broadcast %c0_i32_0 : i32 to vector<1x32xi32>
    %6 = arith.cmpi ne, %4, %5 : vector<1x32xi32>
    %c0_i32_1 = arith.constant 0 : i32
    %7 = vector.broadcast %c0_i32_1 : i32 to vector<1x32xi32>
    %8 = arith.cmpi slt, %4, %7 : vector<1x32xi32>
    %c0_i32_2 = arith.constant 0 : i32
    %9 = arith.cmpi slt, %2, %c0_i32_2 : i32
    %10 = vector.broadcast %9 : i1 to vector<1x32xi1>
    %11 = vector.broadcast %10 : vector<1x32xi1> to vector<1x32xi1>
    %12 = arith.xori %8, %11 : vector<1x32xi1>
    %13 = arith.andi %12, %6 : vector<1x32xi1>
    %14 = vector.broadcast %2 : i32 to vector<1x32xi32>
    %15 = arith.addi %4, %14 : vector<1x32xi32>
    %16 = arith.select %13, %15, %4 : vector<1x32xi1>, vector<1x32xi32>
    %c-2_i32 = arith.constant -2 : i32
    %17 = vector.broadcast %c-2_i32 : i32 to vector<1x32xi32>
    %18 = arith.addi %16, %17 : vector<1x32xi32>
    %c0_i32_3 = arith.constant 0 : i32
    %19 = vector.broadcast %c0_i32_3 : i32 to vector<1x32xi32>
    %20 = arith.cmpi sge, %18, %19 : vector<1x32xi32>
    %c-2_i32_4 = arith.constant -2 : i32
    %21 = vector.broadcast %c-2_i32_4 : i32 to vector<1x32xi32>
    %22 = arith.addi %16, %21 : vector<1x32xi32>
    %c16_i32_5 = arith.constant 16 : i32
    %23 = vector.broadcast %c16_i32_5 : i32 to vector<1x32xi32>
    %24 = arith.cmpi slt, %22, %23 : vector<1x32xi32>
    %25 = arith.andi %20, %24 : vector<1x32xi1>
    %c-1_i32 = arith.constant -1 : i32
    %26 = vector.broadcast %c-1_i32 : i32 to vector<1x32xi32>
    %27 = arith.addi %16, %26 : vector<1x32xi32>
    %c0_i32_6 = arith.constant 0 : i32
    %28 = vector.broadcast %c0_i32_6 : i32 to vector<1x32xi32>
    %29 = arith.cmpi sge, %27, %28 : vector<1x32xi32>
    %c-1_i32_7 = arith.constant -1 : i32
    %30 = vector.broadcast %c-1_i32_7 : i32 to vector<1x32xi32>
    %31 = arith.addi %16, %30 : vector<1x32xi32>
    %c16_i32_8 = arith.constant 16 : i32
    %32 = vector.broadcast %c16_i32_8 : i32 to vector<1x32xi32>
    %33 = arith.cmpi slt, %31, %32 : vector<1x32xi32>
    %34 = arith.andi %29, %33 : vector<1x32xi1>
    %c1_i32_9 = arith.constant 1 : i32
    %35 = vector.broadcast %c1_i32_9 : i32 to vector<1x32xi32>
    %36 = arith.addi %16, %35 : vector<1x32xi32>
    %c0_i32_10 = arith.constant 0 : i32
    %37 = vector.broadcast %c0_i32_10 : i32 to vector<1x32xi32>
    %38 = arith.cmpi sge, %36, %37 : vector<1x32xi32>
    %c1_i32_11 = arith.constant 1 : i32
    %39 = vector.broadcast %c1_i32_11 : i32 to vector<1x32xi32>
    %40 = arith.addi %16, %39 : vector<1x32xi32>
    %c16_i32_12 = arith.constant 16 : i32
    %41 = vector.broadcast %c16_i32_12 : i32 to vector<1x32xi32>
    %42 = arith.cmpi slt, %40, %41 : vector<1x32xi32>
    %43 = arith.andi %38, %42 : vector<1x32xi1>
    %c2_i32 = arith.constant 2 : i32
    %44 = vector.broadcast %c2_i32 : i32 to vector<1x32xi32>
    %45 = arith.addi %16, %44 : vector<1x32xi32>
    %c0_i32_13 = arith.constant 0 : i32
    %46 = vector.broadcast %c0_i32_13 : i32 to vector<1x32xi32>
    %47 = arith.cmpi sge, %45, %46 : vector<1x32xi32>
    %c2_i32_14 = arith.constant 2 : i32
    %48 = vector.broadcast %c2_i32_14 : i32 to vector<1x32xi32>
    %49 = arith.addi %16, %48 : vector<1x32xi32>
    %c16_i32_15 = arith.constant 16 : i32
    %50 = vector.broadcast %c16_i32_15 : i32 to vector<1x32xi32>
    %51 = arith.cmpi slt, %49, %50 : vector<1x32xi32>
    %52 = arith.andi %47, %51 : vector<1x32xi1>
    %c0 = arith.constant 0 : index
    %c0_16 = arith.constant 0 : index
    %53 = vector.load %arg1[%c0, %c0_16] : memref<2x32xf32, #tpu.memory_space<vmem>>, vector<2x32xf32>
    %54 = vector.shape_cast %25 : vector<1x32xi1> to vector<1x32xi1>
    %55 = vector.broadcast %54 : vector<1x32xi1> to vector<2x32xi1>
    %56 = vector.shape_cast %34 : vector<1x32xi1> to vector<1x32xi1>
    %57 = vector.broadcast %56 : vector<1x32xi1> to vector<2x32xi1>
    %58 = vector.shape_cast %43 : vector<1x32xi1> to vector<1x32xi1>
    %59 = vector.broadcast %58 : vector<1x32xi1> to vector<2x32xi1>
    %60 = vector.shape_cast %52 : vector<1x32xi1> to vector<1x32xi1>
    %61 = vector.broadcast %60 : vector<1x32xi1> to vector<2x32xi1>
    %c2_i32_17 = arith.constant 2 : i32
    %62 = tpu.dynamic_rotate %53 by %c2_i32_17 dim 1 : vector<2x32xf32>, i32 -> vector<2x32xf32>
    %cst = arith.constant 0.000000e+00 : f32
    %63 = vector.broadcast %cst : f32 to vector<2x32xf32>
    %64 = arith.select %55, %62, %63 : vector<2x32xi1>, vector<2x32xf32>
    %c0_18 = arith.constant 0 : index
    %c0_19 = arith.constant 0 : index
    %c0_20 = arith.constant 0 : index
    %65 = vector.load %arg2[%c0_18, %c0_19, %c0_20] : memref<5x64x2xf32, #tpu.memory_space<vmem>>, vector<1x64x2xf32>
    %66 = vector.shape_cast %65 : vector<1x64x2xf32> to vector<64x2xf32>
    %cst_21 = arith.constant dense<0.000000e+00> : vector<64x32xf32>
    %67 = tpu.matmul %66, %64, %cst_21 {dimension_numbers = #tpu.dot_dimension_numbers<[1], [0], [0], [1], [0, 0, 1, 1], [], []>} : vector<64x2xf32>, vector<2x32xf32>, vector<64x32xf32> -> vector<64x32xf32>
    %c1_i32_22 = arith.constant 1 : i32
    %68 = tpu.dynamic_rotate %53 by %c1_i32_22 dim 1 : vector<2x32xf32>, i32 -> vector<2x32xf32>
    %cst_23 = arith.constant 0.000000e+00 : f32
    %69 = vector.broadcast %cst_23 : f32 to vector<2x32xf32>
    %70 = arith.select %57, %68, %69 : vector<2x32xi1>, vector<2x32xf32>
    %c1 = arith.constant 1 : index
    %c0_24 = arith.constant 0 : index
    %c0_25 = arith.constant 0 : index
    %71 = vector.load %arg2[%c1, %c0_24, %c0_25] : memref<5x64x2xf32, #tpu.memory_space<vmem>>, vector<1x64x2xf32>
    %72 = vector.shape_cast %71 : vector<1x64x2xf32> to vector<64x2xf32>
    %cst_26 = arith.constant dense<0.000000e+00> : vector<64x32xf32>
    %73 = tpu.matmul %72, %70, %cst_26 {dimension_numbers = #tpu.dot_dimension_numbers<[1], [0], [0], [1], [0, 0, 1, 1], [], []>} : vector<64x2xf32>, vector<2x32xf32>, vector<64x32xf32> -> vector<64x32xf32>
    %74 = arith.addf %67, %73 : vector<64x32xf32>
    %c2 = arith.constant 2 : index
    %c0_27 = arith.constant 0 : index
    %c0_28 = arith.constant 0 : index
    %75 = vector.load %arg2[%c2, %c0_27, %c0_28] : memref<5x64x2xf32, #tpu.memory_space<vmem>>, vector<1x64x2xf32>
    %76 = vector.shape_cast %75 : vector<1x64x2xf32> to vector<64x2xf32>
    %cst_29 = arith.constant dense<0.000000e+00> : vector<64x32xf32>
    %77 = tpu.matmul %76, %53, %cst_29 {dimension_numbers = #tpu.dot_dimension_numbers<[1], [0], [0], [1], [0, 0, 1, 1], [], []>} : vector<64x2xf32>, vector<2x32xf32>, vector<64x32xf32> -> vector<64x32xf32>
    %78 = arith.addf %74, %77 : vector<64x32xf32>
    %c31_i32 = arith.constant 31 : i32
    %79 = tpu.dynamic_rotate %53 by %c31_i32 dim 1 : vector<2x32xf32>, i32 -> vector<2x32xf32>
    %cst_30 = arith.constant 0.000000e+00 : f32
    %80 = vector.broadcast %cst_30 : f32 to vector<2x32xf32>
    %81 = arith.select %59, %79, %80 : vector<2x32xi1>, vector<2x32xf32>
    %c3 = arith.constant 3 : index
    %c0_31 = arith.constant 0 : index
    %c0_32 = arith.constant 0 : index
    %82 = vector.load %arg2[%c3, %c0_31, %c0_32] : memref<5x64x2xf32, #tpu.memory_space<vmem>>, vector<1x64x2xf32>
    %83 = vector.shape_cast %82 : vector<1x64x2xf32> to vector<64x2xf32>
    %cst_33 = arith.constant dense<0.000000e+00> : vector<64x32xf32>
    %84 = tpu.matmul %83, %81, %cst_33 {dimension_numbers = #tpu.dot_dimension_numbers<[1], [0], [0], [1], [0, 0, 1, 1], [], []>} : vector<64x2xf32>, vector<2x32xf32>, vector<64x32xf32> -> vector<64x32xf32>
    %85 = arith.addf %78, %84 : vector<64x32xf32>
    %c30_i32 = arith.constant 30 : i32
    %86 = tpu.dynamic_rotate %53 by %c30_i32 dim 1 : vector<2x32xf32>, i32 -> vector<2x32xf32>
    %cst_34 = arith.constant 0.000000e+00 : f32
    %87 = vector.broadcast %cst_34 : f32 to vector<2x32xf32>
    %88 = arith.select %61, %86, %87 : vector<2x32xi1>, vector<2x32xf32>
    %c4 = arith.constant 4 : index
    %c0_35 = arith.constant 0 : index
    %c0_36 = arith.constant 0 : index
    %89 = vector.load %arg2[%c4, %c0_35, %c0_36] : memref<5x64x2xf32, #tpu.memory_space<vmem>>, vector<1x64x2xf32>
    %90 = vector.shape_cast %89 : vector<1x64x2xf32> to vector<64x2xf32>
    %cst_37 = arith.constant dense<0.000000e+00> : vector<64x32xf32>
    %91 = tpu.matmul %90, %88, %cst_37 {dimension_numbers = #tpu.dot_dimension_numbers<[1], [0], [0], [1], [0, 0, 1, 1], [], []>} : vector<64x2xf32>, vector<2x32xf32>, vector<64x32xf32> -> vector<64x32xf32>
    %92 = arith.addf %85, %91 : vector<64x32xf32>
    %c0_38 = arith.constant 0 : index
    %c0_39 = arith.constant 0 : index
    %93 = vector.load %arg3[%c0_38, %c0_39] : memref<64x1xf32, #tpu.memory_space<vmem>>, vector<64x1xf32>
    %94 = vector.broadcast %93 : vector<64x1xf32> to vector<64x32xf32>
    %95 = arith.addf %92, %94 : vector<64x32xf32>
    %cst_40 = arith.constant 0.000000e+00 : f32
    %96 = vector.broadcast %cst_40 : f32 to vector<64x32xf32>
    %97 = arith.cmpf ogt, %95, %96 : vector<64x32xf32>
    %cst_41 = arith.constant 0.000000e+00 : f32
    %98 = vector.broadcast %cst_41 : f32 to vector<64x32xf32>
    %99 = arith.minimumf %95, %98 : vector<64x32xf32>
    %100 = math.exp %99 : vector<64x32xf32>
    %cst_42 = arith.constant 1.000000e+00 : f32
    %101 = vector.broadcast %cst_42 : f32 to vector<64x32xf32>
    %102 = arith.subf %100, %101 : vector<64x32xf32>
    %103 = arith.select %97, %95, %102 : vector<64x32xi1>, vector<64x32xf32>
    %104 = vector.shape_cast %25 : vector<1x32xi1> to vector<1x32xi1>
    %105 = vector.broadcast %104 : vector<1x32xi1> to vector<64x32xi1>
    %106 = vector.shape_cast %34 : vector<1x32xi1> to vector<1x32xi1>
    %107 = vector.broadcast %106 : vector<1x32xi1> to vector<64x32xi1>
    %108 = vector.shape_cast %43 : vector<1x32xi1> to vector<1x32xi1>
    %109 = vector.broadcast %108 : vector<1x32xi1> to vector<64x32xi1>
    %110 = vector.shape_cast %52 : vector<1x32xi1> to vector<1x32xi1>
    %111 = vector.broadcast %110 : vector<1x32xi1> to vector<64x32xi1>
    %c2_i32_43 = arith.constant 2 : i32
    %112 = tpu.dynamic_rotate %103 by %c2_i32_43 dim 1 : vector<64x32xf32>, i32 -> vector<64x32xf32>
    %cst_44 = arith.constant 0.000000e+00 : f32
    %113 = vector.broadcast %cst_44 : f32 to vector<64x32xf32>
    %114 = arith.select %105, %112, %113 : vector<64x32xi1>, vector<64x32xf32>
    %c0_45 = arith.constant 0 : index
    %c0_46 = arith.constant 0 : index
    %c0_47 = arith.constant 0 : index
    %115 = vector.load %arg4[%c0_45, %c0_46, %c0_47] : memref<5x64x64xf32, #tpu.memory_space<vmem>>, vector<1x64x64xf32>
    %116 = vector.shape_cast %115 : vector<1x64x64xf32> to vector<64x64xf32>
    %cst_48 = arith.constant dense<0.000000e+00> : vector<64x32xf32>
    %117 = tpu.matmul %116, %114, %cst_48 {dimension_numbers = #tpu.dot_dimension_numbers<[1], [0], [0], [1], [0, 0, 1, 1], [], []>} : vector<64x64xf32>, vector<64x32xf32>, vector<64x32xf32> -> vector<64x32xf32>
    %c1_i32_49 = arith.constant 1 : i32
    %118 = tpu.dynamic_rotate %103 by %c1_i32_49 dim 1 : vector<64x32xf32>, i32 -> vector<64x32xf32>
    %cst_50 = arith.constant 0.000000e+00 : f32
    %119 = vector.broadcast %cst_50 : f32 to vector<64x32xf32>
    %120 = arith.select %107, %118, %119 : vector<64x32xi1>, vector<64x32xf32>
    %c1_51 = arith.constant 1 : index
    %c0_52 = arith.constant 0 : index
    %c0_53 = arith.constant 0 : index
    %121 = vector.load %arg4[%c1_51, %c0_52, %c0_53] : memref<5x64x64xf32, #tpu.memory_space<vmem>>, vector<1x64x64xf32>
    %122 = vector.shape_cast %121 : vector<1x64x64xf32> to vector<64x64xf32>
    %cst_54 = arith.constant dense<0.000000e+00> : vector<64x32xf32>
    %123 = tpu.matmul %122, %120, %cst_54 {dimension_numbers = #tpu.dot_dimension_numbers<[1], [0], [0], [1], [0, 0, 1, 1], [], []>} : vector<64x64xf32>, vector<64x32xf32>, vector<64x32xf32> -> vector<64x32xf32>
    %124 = arith.addf %117, %123 : vector<64x32xf32>
    %c2_55 = arith.constant 2 : index
    %c0_56 = arith.constant 0 : index
    %c0_57 = arith.constant 0 : index
    %125 = vector.load %arg4[%c2_55, %c0_56, %c0_57] : memref<5x64x64xf32, #tpu.memory_space<vmem>>, vector<1x64x64xf32>
    %126 = vector.shape_cast %125 : vector<1x64x64xf32> to vector<64x64xf32>
    %cst_58 = arith.constant dense<0.000000e+00> : vector<64x32xf32>
    %127 = tpu.matmul %126, %103, %cst_58 {dimension_numbers = #tpu.dot_dimension_numbers<[1], [0], [0], [1], [0, 0, 1, 1], [], []>} : vector<64x64xf32>, vector<64x32xf32>, vector<64x32xf32> -> vector<64x32xf32>
    %128 = arith.addf %124, %127 : vector<64x32xf32>
    %c31_i32_59 = arith.constant 31 : i32
    %129 = tpu.dynamic_rotate %103 by %c31_i32_59 dim 1 : vector<64x32xf32>, i32 -> vector<64x32xf32>
    %cst_60 = arith.constant 0.000000e+00 : f32
    %130 = vector.broadcast %cst_60 : f32 to vector<64x32xf32>
    %131 = arith.select %109, %129, %130 : vector<64x32xi1>, vector<64x32xf32>
    %c3_61 = arith.constant 3 : index
    %c0_62 = arith.constant 0 : index
    %c0_63 = arith.constant 0 : index
    %132 = vector.load %arg4[%c3_61, %c0_62, %c0_63] : memref<5x64x64xf32, #tpu.memory_space<vmem>>, vector<1x64x64xf32>
    %133 = vector.shape_cast %132 : vector<1x64x64xf32> to vector<64x64xf32>
    %cst_64 = arith.constant dense<0.000000e+00> : vector<64x32xf32>
    %134 = tpu.matmul %133, %131, %cst_64 {dimension_numbers = #tpu.dot_dimension_numbers<[1], [0], [0], [1], [0, 0, 1, 1], [], []>} : vector<64x64xf32>, vector<64x32xf32>, vector<64x32xf32> -> vector<64x32xf32>
    %135 = arith.addf %128, %134 : vector<64x32xf32>
    %c30_i32_65 = arith.constant 30 : i32
    %136 = tpu.dynamic_rotate %103 by %c30_i32_65 dim 1 : vector<64x32xf32>, i32 -> vector<64x32xf32>
    %cst_66 = arith.constant 0.000000e+00 : f32
    %137 = vector.broadcast %cst_66 : f32 to vector<64x32xf32>
    %138 = arith.select %111, %136, %137 : vector<64x32xi1>, vector<64x32xf32>
    %c4_67 = arith.constant 4 : index
    %c0_68 = arith.constant 0 : index
    %c0_69 = arith.constant 0 : index
    %139 = vector.load %arg4[%c4_67, %c0_68, %c0_69] : memref<5x64x64xf32, #tpu.memory_space<vmem>>, vector<1x64x64xf32>
    %140 = vector.shape_cast %139 : vector<1x64x64xf32> to vector<64x64xf32>
    %cst_70 = arith.constant dense<0.000000e+00> : vector<64x32xf32>
    %141 = tpu.matmul %140, %138, %cst_70 {dimension_numbers = #tpu.dot_dimension_numbers<[1], [0], [0], [1], [0, 0, 1, 1], [], []>} : vector<64x64xf32>, vector<64x32xf32>, vector<64x32xf32> -> vector<64x32xf32>
    %142 = arith.addf %135, %141 : vector<64x32xf32>
    %c0_71 = arith.constant 0 : index
    %c0_72 = arith.constant 0 : index
    %143 = vector.load %arg5[%c0_71, %c0_72] : memref<64x1xf32, #tpu.memory_space<vmem>>, vector<64x1xf32>
    %144 = vector.broadcast %143 : vector<64x1xf32> to vector<64x32xf32>
    %145 = arith.addf %142, %144 : vector<64x32xf32>
    %cst_73 = arith.constant 0.000000e+00 : f32
    %146 = vector.broadcast %cst_73 : f32 to vector<64x32xf32>
    %147 = arith.cmpf ogt, %145, %146 : vector<64x32xf32>
    %cst_74 = arith.constant 0.000000e+00 : f32
    %148 = vector.broadcast %cst_74 : f32 to vector<64x32xf32>
    %149 = arith.minimumf %145, %148 : vector<64x32xf32>
    %150 = math.exp %149 : vector<64x32xf32>
    %cst_75 = arith.constant 1.000000e+00 : f32
    %151 = vector.broadcast %cst_75 : f32 to vector<64x32xf32>
    %152 = arith.subf %150, %151 : vector<64x32xf32>
    %153 = arith.select %147, %145, %152 : vector<64x32xi1>, vector<64x32xf32>
    %c0_76 = arith.constant 0 : index
    %c0_77 = arith.constant 0 : index
    %154 = vector.load %arg6[%c0_76, %c0_77] : memref<2x64xf32, #tpu.memory_space<vmem>>, vector<2x64xf32>
    %cst_78 = arith.constant dense<0.000000e+00> : vector<2x32xf32>
    %155 = tpu.matmul %154, %153, %cst_78 {dimension_numbers = #tpu.dot_dimension_numbers<[1], [0], [0], [1], [0, 0, 1, 1], [], []>} : vector<2x64xf32>, vector<64x32xf32>, vector<2x32xf32> -> vector<2x32xf32>
    %c0_79 = arith.constant 0 : index
    %c0_80 = arith.constant 0 : index
    %156 = vector.load %arg7[%c0_79, %c0_80] : memref<2x1xf32, #tpu.memory_space<vmem>>, vector<2x1xf32>
    %157 = vector.broadcast %156 : vector<2x1xf32> to vector<2x32xf32>
    %158 = arith.addf %155, %157 : vector<2x32xf32>
    %cst_81 = arith.constant 0.000000e+00 : f32
    %159 = vector.broadcast %cst_81 : f32 to vector<2x32xf32>
    %160 = arith.cmpf ogt, %158, %159 : vector<2x32xf32>
    %cst_82 = arith.constant 0.000000e+00 : f32
    %161 = vector.broadcast %cst_82 : f32 to vector<2x32xf32>
    %162 = arith.minimumf %158, %161 : vector<2x32xf32>
    %163 = math.exp %162 : vector<2x32xf32>
    %cst_83 = arith.constant 1.000000e+00 : f32
    %164 = vector.broadcast %cst_83 : f32 to vector<2x32xf32>
    %165 = arith.subf %163, %164 : vector<2x32xf32>
    %166 = arith.select %160, %158, %165 : vector<2x32xi1>, vector<2x32xf32>
    %167 = vector.shape_cast %166 : vector<2x32xf32> to vector<1x2x32xf32>
    %cst_84 = arith.constant dense<0.000000e+00> : vector<1xf32>
    %168 = vector.multi_reduction <add>, %167, %cst_84 [1, 2] : vector<1x2x32xf32> to vector<1xf32>
    %169 = vector.shape_cast %168 : vector<1xf32> to vector<1x1x1xf32>
    %170 = vector.extract %169[0, 0, 0] : f32 from vector<1x1x1xf32>
    %171 = arith.mulf %166, %166 : vector<2x32xf32>
    %172 = vector.shape_cast %171 : vector<2x32xf32> to vector<1x2x32xf32>
    %cst_85 = arith.constant dense<0.000000e+00> : vector<1xf32>
    %173 = vector.multi_reduction <add>, %172, %cst_85 [1, 2] : vector<1x2x32xf32> to vector<1xf32>
    %174 = vector.shape_cast %173 : vector<1xf32> to vector<1x1x1xf32>
    %175 = vector.extract %174[0, 0, 0] : f32 from vector<1x1x1xf32>
    %cst_86 = arith.constant 6.400000e+01 : f32
    %176 = arith.divf %170, %cst_86 : f32
    %cst_87 = arith.constant 6.400000e+01 : f32
    %177 = arith.mulf %cst_87, %176 : f32
    %178 = arith.mulf %177, %176 : f32
    %179 = arith.subf %175, %178 : f32
    %cst_88 = arith.constant 6.300000e+01 : f32
    %180 = arith.divf %179, %cst_88 : f32
    %181 = math.rsqrt %180 : f32
    %182 = vector.broadcast %176 : f32 to vector<2x32xf32>
    %183 = arith.subf %166, %182 : vector<2x32xf32>
    %184 = vector.broadcast %181 : f32 to vector<2x32xf32>
    %185 = arith.mulf %183, %184 : vector<2x32xf32>
    %c0_89 = arith.constant 0 : index
    %c0_90 = arith.constant 0 : index
    %186 = vector.load %arg8[%c0_89, %c0_90] : memref<2x32xf32, #tpu.memory_space<vmem>>, vector<2x32xf32>
    tpu.vector_store %arg8[%c0_89, %c0_90], %185 {strides = array<i32>} : memref<2x32xf32, #tpu.memory_space<vmem>>, vector<2x32xf32>,
    return
  }
  func.func @transform_0(%arg0: i32) -> (i32, i32) {
    %c0_i32 = arith.constant 0 : i32
    %c0_i32_0 = arith.constant 0 : i32
    %c0_i32_1 = arith.constant 0 : i32
    return %c0_i32, %c0_i32_0 : i32, i32
  }
  func.func @transform_1(%arg0: i32) -> (i32, i32, i32) {
    %c0_i32 = arith.constant 0 : i32
    %c0_i32_0 = arith.constant 0 : i32
    %c0_i32_1 = arith.constant 0 : i32
    %c0_i32_2 = arith.constant 0 : i32
    return %c0_i32, %c0_i32_0, %c0_i32_1 : i32, i32, i32
  }
  func.func @transform_2(%arg0: i32) -> (i32, i32) {
    %c0_i32 = arith.constant 0 : i32
    %c0_i32_0 = arith.constant 0 : i32
    %c0_i32_1 = arith.constant 0 : i32
    return %c0_i32, %c0_i32_0 : i32, i32
  }
  func.func @transform_3(%arg0: i32) -> (i32, i32, i32) {
    %c0_i32 = arith.constant 0 : i32
    %c0_i32_0 = arith.constant 0 : i32
    %c0_i32_1 = arith.constant 0 : i32
    %c0_i32_2 = arith.constant 0 : i32
    return %c0_i32, %c0_i32_0, %c0_i32_1 : i32, i32, i32
  }
  func.func @transform_4(%arg0: i32) -> (i32, i32) {
    %c0_i32 = arith.constant 0 : i32
    %c0_i32_0 = arith.constant 0 : i32
    %c0_i32_1 = arith.constant 0 : i32
    return %c0_i32, %c0_i32_0 : i32, i32
  }
  func.func @transform_5(%arg0: i32) -> (i32, i32) {
    %c0_i32 = arith.constant 0 : i32
    %c0_i32_0 = arith.constant 0 : i32
    %c0_i32_1 = arith.constant 0 : i32
    return %c0_i32, %c0_i32_0 : i32, i32
  }
  func.func @transform_6(%arg0: i32) -> (i32, i32) {
    %c0_i32 = arith.constant 0 : i32
    %c0_i32_0 = arith.constant 0 : i32
    %c0_i32_1 = arith.constant 0 : i32
    return %c0_i32, %c0_i32_0 : i32, i32
  }
  func.func @transform_7(%arg0: i32) -> (i32, i32) {
    %c0_i32 = arith.constant 0 : i32
    %c0_i32_0 = arith.constant 0 : i32
    %c0_i32_1 = arith.constant 0 : i32
    return %c0_i32, %c0_i32_0 : i32, i32
  }
}

</mosaic_0001>

<llo_original>
// kernel: tpu_custom_call.1
$region0: #{tpu_custom_call.1}
  #allocation0 [shape = 'u32[]', space=smem, size = 0x4, offset = 0x4, fixed_abs, tag = 'smem constant byte address 0x4 - core index']
  #allocation1 [shape = 'u32[72,128]{1,0:T(1,128)}', space=vmem, size = 0x9000, scoped, tag = 'internal scratch']
  %s0 = inlined_call_operand.vmem [shape: f32[2,32], index: 0, kind: input, shape index: {}]
  %s1 = inlined_call_operand.vmem [shape: f32[5,64,2], index: 1, kind: input, shape index: {}]
  %s2 = inlined_call_operand.vmem [shape: f32[64,1], index: 2, kind: input, shape index: {}]
  %s3 = inlined_call_operand.vmem [shape: f32[5,64,64], index: 3, kind: input, shape index: {}]
  %s4 = inlined_call_operand.vmem [shape: f32[64,1], index: 4, kind: input, shape index: {}]
  %s5 = inlined_call_operand.vmem [shape: f32[2,64], index: 5, kind: input, shape index: {}]
  %s6 = inlined_call_operand.vmem [shape: f32[2,1], index: 6, kind: input, shape index: {}]
  %s7 = inlined_call_operand.hbm [shape: f32[2,32], index: 7, kind: output, shape index: {}]
  %s8 = sld [smem:[#allocation0]]
  $region38: #{tpu_custom_call.1} parent=0
    _
  %s10 = ssub.s32 1, %s8
  %s11 = scalar_select 0, %s10, %s8
  $region1: #{tpu_custom_call.1} parent=0
    #allocation2 [shape = 'u8[1024]{0}', space=vmem, size = 0x400, scoped, tag = 'output window, operand 0, single buffered']
    #allocation3 [shape = 's32[1]{0}', space=sflag, size = 0x4, scoped, tag = 'scoped memory for tpu_custom_call.1']
    %12 = vsyncpa [#allocation3], 0
    // Predicated region
    $region2: #{tpu_custom_call.1} parent=1 // pred_check
      _
    $region3: #{tpu_custom_call.1} parent=1 // pred_check_branch
      %14 = sbr.rel (0) target = $region5
    $region4: #{tpu_custom_call.1} parent=1 // pred_region
      _
    $region5: #{tpu_custom_call.1} parent=1 // pred_fallthru
      _
    // Predicated region
    $region6: #{tpu_custom_call.1} parent=1 // pred_check
      _
    $region7: #{tpu_custom_call.1} parent=1 // pred_check_branch
      %16 = sbr.rel (0) target = $region9
    $region8: #{tpu_custom_call.1} parent=1 // pred_region
      _
    $region9: #{tpu_custom_call.1} parent=1 // pred_fallthru
      _
    // Predicated region
    $region10: #{tpu_custom_call.1} parent=1 // pred_check
      _
    $region11: #{tpu_custom_call.1} parent=1 // pred_check_branch
      %18 = sbr.rel (0) target = $region13
    $region12: #{tpu_custom_call.1} parent=1 // pred_region
      _
    $region13: #{tpu_custom_call.1} parent=1 // pred_fallthru
      _
    // Predicated region
    $region14: #{tpu_custom_call.1} parent=1 // pred_check
      _
    $region15: #{tpu_custom_call.1} parent=1 // pred_check_branch
      %20 = sbr.rel (0) target = $region17
    $region16: #{tpu_custom_call.1} parent=1 // pred_region
      _
    $region17: #{tpu_custom_call.1} parent=1 // pred_fallthru
      _
    // Predicated region
    $region18: #{tpu_custom_call.1} parent=1 // pred_check
      _
    $region19: #{tpu_custom_call.1} parent=1 // pred_check_branch
      %22 = sbr.rel (0) target = $region21
    $region20: #{tpu_custom_call.1} parent=1 // pred_region
      _
    $region21: #{tpu_custom_call.1} parent=1 // pred_fallthru
      _
    // Predicated region
    $region22: #{tpu_custom_call.1} parent=1 // pred_check
      _
    $region23: #{tpu_custom_call.1} parent=1 // pred_check_branch
      %24 = sbr.rel (0) target = $region25
    $region24: #{tpu_custom_call.1} parent=1 // pred_region
      _
    $region25: #{tpu_custom_call.1} parent=1 // pred_fallthru
      _
    // Predicated region
    $region26: #{tpu_custom_call.1} parent=1 // pred_check
      _
    $region27: #{tpu_custom_call.1} parent=1 // pred_check_branch
      %26 = sbr.rel (0) target = $region29
    $region28: #{tpu_custom_call.1} parent=1 // pred_region
      _
    $region29: #{tpu_custom_call.1} parent=1 // pred_fallthru
      _
    %v27 = vlaneseq
    %v28 = vand.u32 %v27, 127
    %vm29 = vcmp.lt.s32.totalorder %v28, 0
    %v30 = vsub.s32 0, %v28
    %v31 = vsel %vm29, %v30, %v28
    %v32 = vshrl.u32 %v31, 4
    %v33 = vand.u32 %v31, 15
    %v34 = vsub.s32 0, %v33
    %v35 = vsel %vm29, %v34, %v33
    %vm36 = vcmp.ne.s32.totalorder %v35, 0
    %vm37 = vcmp.lt.s32.totalorder %v35, 0
    %vm38 = vmand %vm37, %vm36
    %v39 = vadd.s32 %v35, 16
    %v40 = vsel %vm38, %v39, %v35
    %v41 = vadd.s32 %v40, 4294967294
    %vm42 = vcmp.ge.s32.totalorder %v41, 0
    %vm43 = vcmp.lt.s32.totalorder %v41, 16
    %vm44 = vmand %vm42, %vm43
    %v45 = vadd.s32 %v40, 4294967295
    %vm46 = vcmp.ge.s32.totalorder %v45, 0
    %vm47 = vcmp.lt.s32.totalorder %v45, 16
    %vm48 = vmand %vm46, %vm47
    %v49 = vadd.s32 %v40, 1
    %vm50 = vcmp.ge.s32.totalorder %v49, 0
    %vm51 = vcmp.lt.s32.totalorder %v49, 16
    %vm52 = vmand %vm50, %vm51
    %v53 = vadd.s32 %v40, 2
    %vm54 = vcmp.ge.s32.totalorder %v53, 0
    %vm55 = vcmp.lt.s32.totalorder %v53, 16
    %vm56 = vmand %vm54, %vm55
    %v57 = vld [vmem:[%s0] sm:$0x3]
    %v58 = vsel %vm44, 1, 0
    %vm59 = vcmp.eq.s32.totalorder %v58, 1
    %v60 = vsel %vm48, 1, 0
    %vm61 = vcmp.eq.s32.totalorder %v60, 1
    %v62 = vsel %vm52, 1, 0
    %vm63 = vcmp.eq.s32.totalorder %v62, 1
    %v64 = vsel %vm56, 1, 0
    %vm65 = vcmp.eq.s32.totalorder %v64, 1
    %vm66 = vcmask 1047808
    %67 = vrot.lane.b32.xlu0 %v57, 32
    %v68 = vpop.permute.xlu0 %67
    %v69 = vsel %vm66, %v68, %v57
    %70 = vrot.lane.b32.xlu0 %v69, 32
    %v71 = vpop.permute.xlu0 %70
    %v72 = vsel %vm66, %v71, %v57
    %74 = vrot.lane.b32.xlu0 %v72, 98
    %v75 = vpop.permute.xlu0 %74
    %v77 = vsel %vm59, %v75, 0.0
    %v78 = vld [vmem:[%s1] sm:$0xff]
    %v79 = vld [vmem:[%s1 + $0x8] sm:$0xff]
    %v80 = vld [vmem:[%s1 + $0x10] sm:$0xff]
    %v81 = vld [vmem:[%s1 + $0x18] sm:$0xff]
    %v82 = vld [vmem:[%s1 + $0x20] sm:$0xff]
    %v83 = vld [vmem:[%s1 + $0x28] sm:$0xff]
    %v84 = vld [vmem:[%s1 + $0x30] sm:$0xff]
    %v85 = vld [vmem:[%s1 + $0x38] sm:$0xff]
    %86 = vrot.lane.b32.xlu0 %v72, 97
    %v87 = vpop.permute.xlu0 %86
    %v89 = vsel %vm61, %v87, 0.0
    %s90 = scalar_lea.vmem %s1, 64
    %v91 = vld [vmem:[%s90] sm:$0xff]
    %v92 = vld [vmem:[%s90 + $0x8] sm:$0xff]
    %v93 = vld [vmem:[%s90 + $0x10] sm:$0xff]
    %v94 = vld [vmem:[%s90 + $0x18] sm:$0xff]
    %v95 = vld [vmem:[%s90 + $0x20] sm:$0xff]
    %v96 = vld [vmem:[%s90 + $0x28] sm:$0xff]
    %v97 = vld [vmem:[%s90 + $0x30] sm:$0xff]
    %v98 = vld [vmem:[%s90 + $0x38] sm:$0xff]
    %vm99 = vcmask 15360
    %v101 = vsel %vm99, %v91, 0
    %v104 = vsel %vm99, %v92, 0
    %v107 = vsel %vm99, %v93, 0
    %v110 = vsel %vm99, %v94, 0
    %v113 = vsel %vm99, %v95, 0
    %v116 = vsel %vm99, %v96, 0
    %v119 = vsel %vm99, %v97, 0
    %v122 = vsel %vm99, %v98, 0
    %vm124 = vcmask 1041408
    %v126 = vsel %vm124, %v89, 0
    %128 = vmatpush.msra.mxu0 0.0
    %129 = vmatpush.msra.mxu0 0.0
    %130 = vmatpush.msra.mxu0 0.0
    %131 = vmatpush.msra.mxu0 0.0
    %132 = vmatpush.msra.mxu0 0.0
    %133 = vmatpush.msra.mxu0 0.0
    %134 = vmatpush.msra.mxu0 0.0
    %135 = vmatpush.msra.mxu0 0.0
    %136 = vmatpush.msra.mxu0 0.0
    %137 = vmatpush.msra.mxu0 0.0
    %138 = vmatpush.msra.mxu0 0.0
    %139 = vmatpush.msra.mxu0 0.0
    %140 = vmatpush.msra.mxu0 0.0
    %141 = vmatpush.msra.mxu0 0.0
    %142 = vmatpush.msra.mxu0 0.0
    %143 = vmatpush.msra.mxu0 %v126
    %144 = vmatmul.f32.gmra.mxu0 %v101
    %v145 = vpop.f32.mrf.mxu0
    %v146 = vadd.f32 0.0, %v145
    %147 = vmatmul.f32.gmra.mxu0 %v104
    %v148 = vpop.f32.mrf.mxu0
    %v149 = vadd.f32 0.0, %v148
    %150 = vmatmul.f32.gmra.mxu0 %v107
    %v151 = vpop.f32.mrf.mxu0
    %v152 = vadd.f32 0.0, %v151
    %153 = vmatmul.f32.gmra.mxu0 %v110
    %v154 = vpop.f32.mrf.mxu0
    %v155 = vadd.f32 0.0, %v154
    %156 = vmatmul.f32.gmra.mxu0 %v113
    %v157 = vpop.f32.mrf.mxu0
    %v158 = vadd.f32 0.0, %v157
    %159 = vmatmul.f32.gmra.mxu0 %v116
    %v160 = vpop.f32.mrf.mxu0
    %v161 = vadd.f32 0.0, %v160
    %162 = vmatmul.f32.gmra.mxu0 %v119
    %v163 = vpop.f32.mrf.mxu0
    %v164 = vadd.f32 0.0, %v163
    %165 = vmatmul.f32.gmra.mxu0 %v122
    %v166 = vpop.f32.mrf.mxu0
    %v167 = vadd.f32 0.0, %v166
    %168 = vdwg.mxu0
    %v170 = vsel %vm99, %v78, 0
    %v173 = vsel %vm99, %v79, 0
    %v176 = vsel %vm99, %v80, 0
    %v179 = vsel %vm99, %v81, 0
    %v182 = vsel %vm99, %v82, 0
    %v185 = vsel %vm99, %v83, 0
    %v188 = vsel %vm99, %v84, 0
    %v191 = vsel %vm99, %v85, 0
    %v194 = vsel %vm124, %v77, 0
    %196 = vmatpush.msra.mxu0 0.0
    %197 = vmatpush.msra.mxu0 0.0
    %198 = vmatpush.msra.mxu0 0.0
    %199 = vmatpush.msra.mxu0 0.0
    %200 = vmatpush.msra.mxu0 0.0
    %201 = vmatpush.msra.mxu0 0.0
    %202 = vmatpush.msra.mxu0 0.0
    %203 = vmatpush.msra.mxu0 0.0
    %204 = vmatpush.msra.mxu0 0.0
    %205 = vmatpush.msra.mxu0 0.0
    %206 = vmatpush.msra.mxu0 0.0
    %207 = vmatpush.msra.mxu0 0.0
    %208 = vmatpush.msra.mxu0 0.0
    %209 = vmatpush.msra.mxu0 0.0
    %210 = vmatpush.msra.mxu0 0.0
    %211 = vmatpush.msra.mxu0 %v194
    %212 = vmatmul.f32.gmra.mxu0 %v170
    %v213 = vpop.f32.mrf.mxu0
    %v214 = vadd.f32 %v146, %v213
    %215 = vmatmul.f32.gmra.mxu0 %v173
    %v216 = vpop.f32.mrf.mxu0
    %v217 = vadd.f32 %v149, %v216
    %218 = vmatmul.f32.gmra.mxu0 %v176
    %v219 = vpop.f32.mrf.mxu0
    %v220 = vadd.f32 %v152, %v219
    %221 = vmatmul.f32.gmra.mxu0 %v179
    %v222 = vpop.f32.mrf.mxu0
    %v223 = vadd.f32 %v155, %v222
    %224 = vmatmul.f32.gmra.mxu0 %v182
    %v225 = vpop.f32.mrf.mxu0
    %v226 = vadd.f32 %v158, %v225
    %227 = vmatmul.f32.gmra.mxu0 %v185
    %v228 = vpop.f32.mrf.mxu0
    %v229 = vadd.f32 %v161, %v228
    %230 = vmatmul.f32.gmra.mxu0 %v188
    %v231 = vpop.f32.mrf.mxu0
    %v232 = vadd.f32 %v164, %v231
    %233 = vmatmul.f32.gmra.mxu0 %v191
    %v234 = vpop.f32.mrf.mxu0
    %v235 = vadd.f32 %v167, %v234
    %236 = vdwg.mxu0
    %s237 = scalar_lea.vmem %s1, 128
    %v238 = vld [vmem:[%s237] sm:$0xff]
    %v239 = vld [vmem:[%s237 + $0x8] sm:$0xff]
    %v240 = vld [vmem:[%s237 + $0x10] sm:$0xff]
    %v241 = vld [vmem:[%s237 + $0x18] sm:$0xff]
    %v242 = vld [vmem:[%s237 + $0x20] sm:$0xff]
    %v243 = vld [vmem:[%s237 + $0x28] sm:$0xff]
    %v244 = vld [vmem:[%s237 + $0x30] sm:$0xff]
    %v245 = vld [vmem:[%s237 + $0x38] sm:$0xff]
    %v247 = vsel %vm99, %v238, 0
    %v250 = vsel %vm99, %v239, 0
    %v253 = vsel %vm99, %v240, 0
    %v256 = vsel %vm99, %v241, 0
    %v259 = vsel %vm99, %v242, 0
    %v262 = vsel %vm99, %v243, 0
    %v265 = vsel %vm99, %v244, 0
    %v268 = vsel %vm99, %v245, 0
    %v271 = vsel %vm124, %v57, 0
    %273 = vmatpush.msra.mxu0 0.0
    %274 = vmatpush.msra.mxu0 0.0
    %275 = vmatpush.msra.mxu0 0.0
    %276 = vmatpush.msra.mxu0 0.0
    %277 = vmatpush.msra.mxu0 0.0
    %278 = vmatpush.msra.mxu0 0.0
    %279 = vmatpush.msra.mxu0 0.0
    %280 = vmatpush.msra.mxu0 0.0
    %281 = vmatpush.msra.mxu0 0.0
    %282 = vmatpush.msra.mxu0 0.0
    %283 = vmatpush.msra.mxu0 0.0
    %284 = vmatpush.msra.mxu0 0.0
    %285 = vmatpush.msra.mxu0 0.0
    %286 = vmatpush.msra.mxu0 0.0
    %287 = vmatpush.msra.mxu0 0.0
    %288 = vmatpush.msra.mxu0 %v271
    %289 = vmatmul.f32.gmra.mxu0 %v247
    %v290 = vpop.f32.mrf.mxu0
    %v291 = vadd.f32 0.0, %v290
    %292 = vmatmul.f32.gmra.mxu0 %v250
    %v293 = vpop.f32.mrf.mxu0
    %v294 = vadd.f32 0.0, %v293
    %295 = vmatmul.f32.gmra.mxu0 %v253
    %v296 = vpop.f32.mrf.mxu0
    %v297 = vadd.f32 0.0, %v296
    %298 = vmatmul.f32.gmra.mxu0 %v256
    %v299 = vpop.f32.mrf.mxu0
    %v300 = vadd.f32 0.0, %v299
    %301 = vmatmul.f32.gmra.mxu0 %v259
    %v302 = vpop.f32.mrf.mxu0
    %v303 = vadd.f32 0.0, %v302
    %304 = vmatmul.f32.gmra.mxu0 %v262
    %v305 = vpop.f32.mrf.mxu0
    %v306 = vadd.f32 0.0, %v305
    %307 = vmatmul.f32.gmra.mxu0 %v265
    %v308 = vpop.f32.mrf.mxu0
    %v309 = vadd.f32 0.0, %v308
    %310 = vmatmul.f32.gmra.mxu0 %v268
    %v311 = vpop.f32.mrf.mxu0
    %v312 = vadd.f32 0.0, %v311
    %313 = vdwg.mxu0
    %v314 = vadd.f32 %v214, %v291
    %v315 = vadd.f32 %v217, %v294
    %v316 = vadd.f32 %v220, %v297
    %v317 = vadd.f32 %v223, %v300
    %v318 = vadd.f32 %v226, %v303
    %v319 = vadd.f32 %v229, %v306
    %v320 = vadd.f32 %v232, %v309
    %v321 = vadd.f32 %v235, %v312
    %322 = vrot.lane.b32.xlu0 %v72, 127
    %v323 = vpop.permute.xlu0 %322
    %v325 = vsel %vm63, %v323, 0.0
    %s326 = scalar_lea.vmem %s1, 192
    %v327 = vld [vmem:[%s326] sm:$0xff]
    %v328 = vld [vmem:[%s326 + $0x8] sm:$0xff]
    %v329 = vld [vmem:[%s326 + $0x10] sm:$0xff]
    %v330 = vld [vmem:[%s326 + $0x18] sm:$0xff]
    %v331 = vld [vmem:[%s326 + $0x20] sm:$0xff]
    %v332 = vld [vmem:[%s326 + $0x28] sm:$0xff]
    %v333 = vld [vmem:[%s326 + $0x30] sm:$0xff]
    %v334 = vld [vmem:[%s326 + $0x38] sm:$0xff]
    %v336 = vsel %vm99, %v327, 0
    %v339 = vsel %vm99, %v328, 0
    %v342 = vsel %vm99, %v329, 0
    %v345 = vsel %vm99, %v330, 0
    %v348 = vsel %vm99, %v331, 0
    %v351 = vsel %vm99, %v332, 0
    %v354 = vsel %vm99, %v333, 0
    %v357 = vsel %vm99, %v334, 0
    %v360 = vsel %vm124, %v325, 0
    %362 = vmatpush.msra.mxu0 0.0
    %363 = vmatpush.msra.mxu0 0.0
    %364 = vmatpush.msra.mxu0 0.0
    %365 = vmatpush.msra.mxu0 0.0
    %366 = vmatpush.msra.mxu0 0.0
    %367 = vmatpush.msra.mxu0 0.0
    %368 = vmatpush.msra.mxu0 0.0
    %369 = vmatpush.msra.mxu0 0.0
    %370 = vmatpush.msra.mxu0 0.0
    %371 = vmatpush.msra.mxu0 0.0
    %372 = vmatpush.msra.mxu0 0.0
    %373 = vmatpush.msra.mxu0 0.0
    %374 = vmatpush.msra.mxu0 0.0
    %375 = vmatpush.msra.mxu0 0.0
    %376 = vmatpush.msra.mxu0 0.0
    %377 = vmatpush.msra.mxu0 %v360
    %378 = vmatmul.f32.gmra.mxu0 %v336
    %v379 = vpop.f32.mrf.mxu0
    %v380 = vadd.f32 0.0, %v379
    %381 = vmatmul.f32.gmra.mxu0 %v339
    %v382 = vpop.f32.mrf.mxu0
    %v383 = vadd.f32 0.0, %v382
    %384 = vmatmul.f32.gmra.mxu0 %v342
    %v385 = vpop.f32.mrf.mxu0
    %v386 = vadd.f32 0.0, %v385
    %387 = vmatmul.f32.gmra.mxu0 %v345
    %v388 = vpop.f32.mrf.mxu0
    %v389 = vadd.f32 0.0, %v388
    %390 = vmatmul.f32.gmra.mxu0 %v348
    %v391 = vpop.f32.mrf.mxu0
    %v392 = vadd.f32 0.0, %v391
    %393 = vmatmul.f32.gmra.mxu0 %v351
    %v394 = vpop.f32.mrf.mxu0
    %v395 = vadd.f32 0.0, %v394
    %396 = vmatmul.f32.gmra.mxu0 %v354
    %v397 = vpop.f32.mrf.mxu0
    %v398 = vadd.f32 0.0, %v397
    %399 = vmatmul.f32.gmra.mxu0 %v357
    %v400 = vpop.f32.mrf.mxu0
    %v401 = vadd.f32 0.0, %v400
    %402 = vdwg.mxu0
    %v403 = vadd.f32 %v314, %v380
    %v404 = vadd.f32 %v315, %v383
    %v405 = vadd.f32 %v316, %v386
    %v406 = vadd.f32 %v317, %v389
    %v407 = vadd.f32 %v318, %v392
    %v408 = vadd.f32 %v319, %v395
    %v409 = vadd.f32 %v320, %v398
    %v410 = vadd.f32 %v321, %v401
    %411 = vrot.lane.b32.xlu0 %v72, 126
    %v412 = vpop.permute.xlu0 %411
    %v414 = vsel %vm65, %v412, 0.0
    %s415 = scalar_lea.vmem %s1, 256
    %v416 = vld [vmem:[%s415] sm:$0xff]
    %v417 = vld [vmem:[%s415 + $0x8] sm:$0xff]
    %v418 = vld [vmem:[%s415 + $0x10] sm:$0xff]
    %v419 = vld [vmem:[%s415 + $0x18] sm:$0xff]
    %v420 = vld [vmem:[%s415 + $0x20] sm:$0xff]
    %v421 = vld [vmem:[%s415 + $0x28] sm:$0xff]
    %v422 = vld [vmem:[%s415 + $0x30] sm:$0xff]
    %v423 = vld [vmem:[%s415 + $0x38] sm:$0xff]
    %v425 = vsel %vm99, %v416, 0
    %v428 = vsel %vm99, %v417, 0
    %v431 = vsel %vm99, %v418, 0
    %v434 = vsel %vm99, %v419, 0
    %v437 = vsel %vm99, %v420, 0
    %v440 = vsel %vm99, %v421, 0
    %v443 = vsel %vm99, %v422, 0
    %v446 = vsel %vm99, %v423, 0
    %v449 = vsel %vm124, %v414, 0
    %451 = vmatpush.msra.mxu0 0.0
    %452 = vmatpush.msra.mxu0 0.0
    %453 = vmatpush.msra.mxu0 0.0
    %454 = vmatpush.msra.mxu0 0.0
    %455 = vmatpush.msra.mxu0 0.0
    %456 = vmatpush.msra.mxu0 0.0
    %457 = vmatpush.msra.mxu0 0.0
    %458 = vmatpush.msra.mxu0 0.0
    %459 = vmatpush.msra.mxu0 0.0
    %460 = vmatpush.msra.mxu0 0.0
    %461 = vmatpush.msra.mxu0 0.0
    %462 = vmatpush.msra.mxu0 0.0
    %463 = vmatpush.msra.mxu0 0.0
    %464 = vmatpush.msra.mxu0 0.0
    %465 = vmatpush.msra.mxu0 0.0
    %466 = vmatpush.msra.mxu0 %v449
    %467 = vmatmul.f32.gmra.mxu0 %v425
    %v468 = vpop.f32.mrf.mxu0
    %v469 = vadd.f32 0.0, %v468
    %470 = vmatmul.f32.gmra.mxu0 %v428
    %v471 = vpop.f32.mrf.mxu0
    %v472 = vadd.f32 0.0, %v471
    %473 = vmatmul.f32.gmra.mxu0 %v431
    %v474 = vpop.f32.mrf.mxu0
    %v475 = vadd.f32 0.0, %v474
    %476 = vmatmul.f32.gmra.mxu0 %v434
    %v477 = vpop.f32.mrf.mxu0
    %v478 = vadd.f32 0.0, %v477
    %479 = vmatmul.f32.gmra.mxu0 %v437
    %v480 = vpop.f32.mrf.mxu0
    %v481 = vadd.f32 0.0, %v480
    %482 = vmatmul.f32.gmra.mxu0 %v440
    %v483 = vpop.f32.mrf.mxu0
    %v484 = vadd.f32 0.0, %v483
    %485 = vmatmul.f32.gmra.mxu0 %v443
    %v486 = vpop.f32.mrf.mxu0
    %v487 = vadd.f32 0.0, %v486
    %488 = vmatmul.f32.gmra.mxu0 %v446
    %v489 = vpop.f32.mrf.mxu0
    %v490 = vadd.f32 0.0, %v489
    %491 = vdwg.mxu0
    %v492 = vadd.f32 %v403, %v469
    %v493 = vadd.f32 %v404, %v472
    %v494 = vadd.f32 %v405, %v475
    %v495 = vadd.f32 %v406, %v478
    %v496 = vadd.f32 %v407, %v481
    %v497 = vadd.f32 %v408, %v484
    %v498 = vadd.f32 %v409, %v487
    %v499 = vadd.f32 %v410, %v490
    %v500 = vld [vmem:[%s2] sm:$0xff]
    %v501 = vld [vmem:[%s2 + $0x8] sm:$0xff]
    %v502 = vld [vmem:[%s2 + $0x10] sm:$0xff]
    %v503 = vld [vmem:[%s2 + $0x18] sm:$0xff]
    %v504 = vld [vmem:[%s2 + $0x20] sm:$0xff]
    %v505 = vld [vmem:[%s2 + $0x28] sm:$0xff]
    %v506 = vld [vmem:[%s2 + $0x30] sm:$0xff]
    %v507 = vld [vmem:[%s2 + $0x38] sm:$0xff]
    %509 = vset.pattern.permute.xlu0 0
    %510 = vperm.xlu0 %509, %v500
    %v511 = vpop.permute.xlu0 %510
    %514 = vset.pattern.permute.xlu0 0
    %515 = vperm.xlu0 %514, %v501
    %v516 = vpop.permute.xlu0 %515
    %519 = vset.pattern.permute.xlu0 0
    %520 = vperm.xlu0 %519, %v502
    %v521 = vpop.permute.xlu0 %520
    %524 = vset.pattern.permute.xlu0 0
    %525 = vperm.xlu0 %524, %v503
    %v526 = vpop.permute.xlu0 %525
    %529 = vset.pattern.permute.xlu0 0
    %530 = vperm.xlu0 %529, %v504
    %v531 = vpop.permute.xlu0 %530
    %534 = vset.pattern.permute.xlu0 0
    %535 = vperm.xlu0 %534, %v505
    %v536 = vpop.permute.xlu0 %535
    %539 = vset.pattern.permute.xlu0 0
    %540 = vperm.xlu0 %539, %v506
    %v541 = vpop.permute.xlu0 %540
    %544 = vset.pattern.permute.xlu0 0
    %545 = vperm.xlu0 %544, %v507
    %v546 = vpop.permute.xlu0 %545
    %v548 = vadd.f32 %v492, %v511
    %v549 = vadd.f32 %v493, %v516
    %v550 = vadd.f32 %v494, %v521
    %v551 = vadd.f32 %v495, %v526
    %v552 = vadd.f32 %v496, %v531
    %v553 = vadd.f32 %v497, %v536
    %v554 = vadd.f32 %v498, %v541
    %v555 = vadd.f32 %v499, %v546
    %vm556 = vcmp.gt.f32.partialorder %v548, 0.0
    %vm557 = vcmp.gt.f32.partialorder %v549, 0.0
    %vm558 = vcmp.gt.f32.partialorder %v550, 0.0
    %vm559 = vcmp.gt.f32.partialorder %v551, 0.0
    %vm560 = vcmp.gt.f32.partialorder %v552, 0.0
    %vm561 = vcmp.gt.f32.partialorder %v553, 0.0
    %vm562 = vcmp.gt.f32.partialorder %v554, 0.0
    %vm563 = vcmp.gt.f32.partialorder %v555, 0.0
    %v564 = vmin.f32 %v548, 0.0
    %v565 = vmin.f32 %v549, 0.0
    %v566 = vmin.f32 %v550, 0.0
    %v567 = vmin.f32 %v551, 0.0
    %v568 = vmin.f32 %v552, 0.0
    %v569 = vmin.f32 %v553, 0.0
    %v570 = vmin.f32 %v554, 0.0
    %v571 = vmin.f32 %v555, 0.0
    %v572 = vmul.f32 %v564, 1.442695
    %v573 = vpow.pop %v572
    %v574 = vmul.f32 %v565, 1.442695
    %v575 = vpow.pop %v574
    %v576 = vmul.f32 %v566, 1.442695
    %v577 = vpow.pop %v576
    %v578 = vmul.f32 %v567, 1.442695
    %v579 = vpow.pop %v578
    %v580 = vmul.f32 %v568, 1.442695
    %v581 = vpow.pop %v580
    %v582 = vmul.f32 %v569, 1.442695
    %v583 = vpow.pop %v582
    %v584 = vmul.f32 %v570, 1.442695
    %v585 = vpow.pop %v584
    %v586 = vmul.f32 %v571, 1.442695
    %v587 = vpow.pop %v586
    %v588 = vsub.f32 %v573, 1.0
    %v589 = vsub.f32 %v575, 1.0
    %v590 = vsub.f32 %v577, 1.0
    %v591 = vsub.f32 %v579, 1.0
    %v592 = vsub.f32 %v581, 1.0
    %v593 = vsub.f32 %v583, 1.0
    %v594 = vsub.f32 %v585, 1.0
    %v595 = vsub.f32 %v587, 1.0
    %v596 = vsel %vm556, %v548, %v588
    %v597 = vsel %vm557, %v549, %v589
    %v598 = vsel %vm558, %v550, %v590
    %v599 = vsel %vm559, %v551, %v591
    %v600 = vsel %vm560, %v552, %v592
    %v601 = vsel %vm561, %v553, %v593
    %v602 = vsel %vm562, %v554, %v594
    %v603 = vsel %vm563, %v555, %v595
    %604 = vrot.lane.b32.xlu0 %v596, 32
    %v605 = vpop.permute.xlu0 %604
    %v606 = vsel %vm66, %v605, %v596
    %607 = vrot.lane.b32.xlu0 %v597, 32
    %v608 = vpop.permute.xlu0 %607
    %v609 = vsel %vm66, %v608, %v597
    %610 = vrot.lane.b32.xlu0 %v598, 32
    %v611 = vpop.permute.xlu0 %610
    %v612 = vsel %vm66, %v611, %v598
    %613 = vrot.lane.b32.xlu0 %v599, 32
    %v614 = vpop.permute.xlu0 %613
    %v615 = vsel %vm66, %v614, %v599
    %616 = vrot.lane.b32.xlu0 %v600, 32
    %v617 = vpop.permute.xlu0 %616
    %v618 = vsel %vm66, %v617, %v600
    %619 = vrot.lane.b32.xlu0 %v601, 32
    %v620 = vpop.permute.xlu0 %619
    %v621 = vsel %vm66, %v620, %v601
    %622 = vrot.lane.b32.xlu0 %v602, 32
    %v623 = vpop.permute.xlu0 %622
    %v624 = vsel %vm66, %v623, %v602
    %625 = vrot.lane.b32.xlu0 %v603, 32
    %v626 = vpop.permute.xlu0 %625
    %v627 = vsel %vm66, %v626, %v603
    %628 = vrot.lane.b32.xlu0 %v606, 32
    %v629 = vpop.permute.xlu0 %628
    %630 = vrot.lane.b32.xlu0 %v609, 32
    %v631 = vpop.permute.xlu0 %630
    %632 = vrot.lane.b32.xlu0 %v612, 32
    %v633 = vpop.permute.xlu0 %632
    %634 = vrot.lane.b32.xlu0 %v615, 32
    %v635 = vpop.permute.xlu0 %634
    %636 = vrot.lane.b32.xlu0 %v618, 32
    %v637 = vpop.permute.xlu0 %636
    %638 = vrot.lane.b32.xlu0 %v621, 32
    %v639 = vpop.permute.xlu0 %638
    %640 = vrot.lane.b32.xlu0 %v624, 32
    %v641 = vpop.permute.xlu0 %640
    %642 = vrot.lane.b32.xlu0 %v627, 32
    %v643 = vpop.permute.xlu0 %642
    %v644 = vsel %vm66, %v629, %v596
    %v645 = vsel %vm66, %v631, %v597
    %v646 = vsel %vm66, %v633, %v598
    %v647 = vsel %vm66, %v635, %v599
    %v648 = vsel %vm66, %v637, %v600
    %v649 = vsel %vm66, %v639, %v601
    %v650 = vsel %vm66, %v641, %v602
    %v651 = vsel %vm66, %v643, %v603
    %660 = vrot.lane.b32.xlu0 %v644, 98
    %v661 = vpop.permute.xlu0 %660
    %662 = vrot.lane.b32.xlu0 %v645, 98
    %v663 = vpop.permute.xlu0 %662
    %664 = vrot.lane.b32.xlu0 %v646, 98
    %v665 = vpop.permute.xlu0 %664
    %666 = vrot.lane.b32.xlu0 %v647, 98
    %v667 = vpop.permute.xlu0 %666
    %668 = vrot.lane.b32.xlu0 %v648, 98
    %v669 = vpop.permute.xlu0 %668
    %670 = vrot.lane.b32.xlu0 %v649, 98
    %v671 = vpop.permute.xlu0 %670
    %672 = vrot.lane.b32.xlu0 %v650, 98
    %v673 = vpop.permute.xlu0 %672
    %674 = vrot.lane.b32.xlu0 %v651, 98
    %v675 = vpop.permute.xlu0 %674
    %v684 = vsel %vm59, %v661, 0.0
    %v685 = vsel %vm59, %v663, 0.0
    %v686 = vsel %vm59, %v665, 0.0
    %v687 = vsel %vm59, %v667, 0.0
    %v688 = vsel %vm59, %v669, 0.0
    %v689 = vsel %vm59, %v671, 0.0
    %v690 = vsel %vm59, %v673, 0.0
    %v691 = vsel %vm59, %v675, 0.0
    %v692 = vld [vmem:[%s3] sm:$0xff]
    %v693 = vld [vmem:[%s3 + $0x8] sm:$0xff]
    %v694 = vld [vmem:[%s3 + $0x10] sm:$0xff]
    %v695 = vld [vmem:[%s3 + $0x18] sm:$0xff]
    %v696 = vld [vmem:[%s3 + $0x20] sm:$0xff]
    %v697 = vld [vmem:[%s3 + $0x28] sm:$0xff]
    %v698 = vld [vmem:[%s3 + $0x30] sm:$0xff]
    %v699 = vld [vmem:[%s3 + $0x38] sm:$0xff]
    %700 = vrot.lane.b32.xlu0 %v644, 97
    %v701 = vpop.permute.xlu0 %700
    %702 = vrot.lane.b32.xlu0 %v645, 97
    %v703 = vpop.permute.xlu0 %702
    %704 = vrot.lane.b32.xlu0 %v646, 97
    %v705 = vpop.permute.xlu0 %704
    %706 = vrot.lane.b32.xlu0 %v647, 97
    %v707 = vpop.permute.xlu0 %706
    %708 = vrot.lane.b32.xlu0 %v648, 97
    %v709 = vpop.permute.xlu0 %708
    %710 = vrot.lane.b32.xlu0 %v649, 97
    %v711 = vpop.permute.xlu0 %710
    %712 = vrot.lane.b32.xlu0 %v650, 97
    %v713 = vpop.permute.xlu0 %712
    %714 = vrot.lane.b32.xlu0 %v651, 97
    %v715 = vpop.permute.xlu0 %714
    %v724 = vsel %vm61, %v701, 0.0
    %v725 = vsel %vm61, %v703, 0.0
    %v726 = vsel %vm61, %v705, 0.0
    %v727 = vsel %vm61, %v707, 0.0
    %v728 = vsel %vm61, %v709, 0.0
    %v729 = vsel %vm61, %v711, 0.0
    %v730 = vsel %vm61, %v713, 0.0
    %v731 = vsel %vm61, %v715, 0.0
    %s732 = scalar_lea.vmem %s3, 64
    %v733 = vld [vmem:[%s732] sm:$0xff]
    %v734 = vld [vmem:[%s732 + $0x8] sm:$0xff]
    %v735 = vld [vmem:[%s732 + $0x10] sm:$0xff]
    %v736 = vld [vmem:[%s732 + $0x18] sm:$0xff]
    %v737 = vld [vmem:[%s732 + $0x20] sm:$0xff]
    %v738 = vld [vmem:[%s732 + $0x28] sm:$0xff]
    %v739 = vld [vmem:[%s732 + $0x30] sm:$0xff]
    %v740 = vld [vmem:[%s732 + $0x38] sm:$0xff]
    %vm741 = vcmask 523264
    %v743 = vsel %vm741, %v733, 0
    %v746 = vsel %vm741, %v734, 0
    %v749 = vsel %vm741, %v735, 0
    %v752 = vsel %vm741, %v736, 0
    %v755 = vsel %vm741, %v737, 0
    %v758 = vsel %vm741, %v738, 0
    %v761 = vsel %vm741, %v739, 0
    %v764 = vsel %vm741, %v740, 0
    %766 = vmatpush.msra.mxu0 0.0
    %767 = vmatpush.msra.mxu0 0.0
    %768 = vmatpush.msra.mxu0 0.0
    %769 = vmatpush.msra.mxu0 0.0
    %770 = vmatpush.msra.mxu0 0.0
    %771 = vmatpush.msra.mxu0 0.0
    %772 = vmatpush.msra.mxu0 0.0
    %773 = vmatpush.msra.mxu0 0.0
    %774 = vmatpush.msra.mxu0 %v731
    %775 = vmatpush.msra.mxu0 %v730
    %776 = vmatpush.msra.mxu0 %v729
    %777 = vmatpush.msra.mxu0 %v728
    %778 = vmatpush.msra.mxu0 %v727
    %779 = vmatpush.msra.mxu0 %v726
    %780 = vmatpush.msra.mxu0 %v725
    %781 = vmatpush.msra.mxu0 %v724
    %782 = vmatmul.f32.gmra.mxu0 %v743
    %v783 = vpop.f32.mrf.mxu0
    %v784 = vadd.f32 0.0, %v783
    %785 = vmatmul.f32.gmra.mxu0 %v746
    %v786 = vpop.f32.mrf.mxu0
    %v787 = vadd.f32 0.0, %v786
    %788 = vmatmul.f32.gmra.mxu0 %v749
    %v789 = vpop.f32.mrf.mxu0
    %v790 = vadd.f32 0.0, %v789
    %791 = vmatmul.f32.gmra.mxu0 %v752
    %v792 = vpop.f32.mrf.mxu0
    %v793 = vadd.f32 0.0, %v792
    %794 = vmatmul.f32.gmra.mxu0 %v755
    %v795 = vpop.f32.mrf.mxu0
    %v796 = vadd.f32 0.0, %v795
    %797 = vmatmul.f32.gmra.mxu0 %v758
    %v798 = vpop.f32.mrf.mxu0
    %v799 = vadd.f32 0.0, %v798
    %800 = vmatmul.f32.gmra.mxu0 %v761
    %v801 = vpop.f32.mrf.mxu0
    %v802 = vadd.f32 0.0, %v801
    %803 = vmatmul.f32.gmra.mxu0 %v764
    %v804 = vpop.f32.mrf.mxu0
    %v805 = vadd.f32 0.0, %v804
    %806 = vdwg.mxu0
    %v808 = vsel %vm741, %v692, 0
    %v811 = vsel %vm741, %v693, 0
    %v814 = vsel %vm741, %v694, 0
    %v817 = vsel %vm741, %v695, 0
    %v820 = vsel %vm741, %v696, 0
    %v823 = vsel %vm741, %v697, 0
    %v826 = vsel %vm741, %v698, 0
    %v829 = vsel %vm741, %v699, 0
    %831 = vmatpush.msra.mxu0 0.0
    %832 = vmatpush.msra.mxu0 0.0
    %833 = vmatpush.msra.mxu0 0.0
    %834 = vmatpush.msra.mxu0 0.0
    %835 = vmatpush.msra.mxu0 0.0
    %836 = vmatpush.msra.mxu0 0.0
    %837 = vmatpush.msra.mxu0 0.0
    %838 = vmatpush.msra.mxu0 0.0
    %839 = vmatpush.msra.mxu0 %v691
    %840 = vmatpush.msra.mxu0 %v690
    %841 = vmatpush.msra.mxu0 %v689
    %842 = vmatpush.msra.mxu0 %v688
    %843 = vmatpush.msra.mxu0 %v687
    %844 = vmatpush.msra.mxu0 %v686
    %845 = vmatpush.msra.mxu0 %v685
    %846 = vmatpush.msra.mxu0 %v684
    %847 = vmatmul.f32.gmra.mxu0 %v808
    %v848 = vpop.f32.mrf.mxu0
    %v849 = vadd.f32 %v784, %v848
    %850 = vmatmul.f32.gmra.mxu0 %v811
    %v851 = vpop.f32.mrf.mxu0
    %v852 = vadd.f32 %v787, %v851
    %853 = vmatmul.f32.gmra.mxu0 %v814
    %v854 = vpop.f32.mrf.mxu0
    %v855 = vadd.f32 %v790, %v854
    %856 = vmatmul.f32.gmra.mxu0 %v817
    %v857 = vpop.f32.mrf.mxu0
    %v858 = vadd.f32 %v793, %v857
    %859 = vmatmul.f32.gmra.mxu0 %v820
    %v860 = vpop.f32.mrf.mxu0
    %v861 = vadd.f32 %v796, %v860
    %862 = vmatmul.f32.gmra.mxu0 %v823
    %v863 = vpop.f32.mrf.mxu0
    %v864 = vadd.f32 %v799, %v863
    %865 = vmatmul.f32.gmra.mxu0 %v826
    %v866 = vpop.f32.mrf.mxu0
    %v867 = vadd.f32 %v802, %v866
    %868 = vmatmul.f32.gmra.mxu0 %v829
    %v869 = vpop.f32.mrf.mxu0
    %v870 = vadd.f32 %v805, %v869
    %871 = vdwg.mxu0
    %s872 = scalar_lea.vmem %s3, 128
    %v873 = vld [vmem:[%s872] sm:$0xff]
    %v874 = vld [vmem:[%s872 + $0x8] sm:$0xff]
    %v875 = vld [vmem:[%s872 + $0x10] sm:$0xff]
    %v876 = vld [vmem:[%s872 + $0x18] sm:$0xff]
    %v877 = vld [vmem:[%s872 + $0x20] sm:$0xff]
    %v878 = vld [vmem:[%s872 + $0x28] sm:$0xff]
    %v879 = vld [vmem:[%s872 + $0x30] sm:$0xff]
    %v880 = vld [vmem:[%s872 + $0x38] sm:$0xff]
    %v882 = vsel %vm741, %v873, 0
    %v885 = vsel %vm741, %v874, 0
    %v888 = vsel %vm741, %v875, 0
    %v891 = vsel %vm741, %v876, 0
    %v894 = vsel %vm741, %v877, 0
    %v897 = vsel %vm741, %v878, 0
    %v900 = vsel %vm741, %v879, 0
    %v903 = vsel %vm741, %v880, 0
    %905 = vmatpush.msra.mxu0 0.0
    %906 = vmatpush.msra.mxu0 0.0
    %907 = vmatpush.msra.mxu0 0.0
    %908 = vmatpush.msra.mxu0 0.0
    %909 = vmatpush.msra.mxu0 0.0
    %910 = vmatpush.msra.mxu0 0.0
    %911 = vmatpush.msra.mxu0 0.0
    %912 = vmatpush.msra.mxu0 0.0
    %913 = vmatpush.msra.mxu0 %v603
    %914 = vmatpush.msra.mxu0 %v602
    %915 = vmatpush.msra.mxu0 %v601
    %916 = vmatpush.msra.mxu0 %v600
    %917 = vmatpush.msra.mxu0 %v599
    %918 = vmatpush.msra.mxu0 %v598
    %919 = vmatpush.msra.mxu0 %v597
    %920 = vmatpush.msra.mxu0 %v596
    %921 = vmatmul.f32.gmra.mxu0 %v882
    %v922 = vpop.f32.mrf.mxu0
    %v923 = vadd.f32 0.0, %v922
    %924 = vmatmul.f32.gmra.mxu0 %v885
    %v925 = vpop.f32.mrf.mxu0
    %v926 = vadd.f32 0.0, %v925
    %927 = vmatmul.f32.gmra.mxu0 %v888
    %v928 = vpop.f32.mrf.mxu0
    %v929 = vadd.f32 0.0, %v928
    %930 = vmatmul.f32.gmra.mxu0 %v891
    %v931 = vpop.f32.mrf.mxu0
    %v932 = vadd.f32 0.0, %v931
    %933 = vmatmul.f32.gmra.mxu0 %v894
    %v934 = vpop.f32.mrf.mxu0
    %v935 = vadd.f32 0.0, %v934
    %936 = vmatmul.f32.gmra.mxu0 %v897
    %v937 = vpop.f32.mrf.mxu0
    %v938 = vadd.f32 0.0, %v937
    %939 = vmatmul.f32.gmra.mxu0 %v900
    %v940 = vpop.f32.mrf.mxu0
    %v941 = vadd.f32 0.0, %v940
    %942 = vmatmul.f32.gmra.mxu0 %v903
    %v943 = vpop.f32.mrf.mxu0
    %v944 = vadd.f32 0.0, %v943
    %945 = vdwg.mxu0
    %v946 = vadd.f32 %v849, %v923
    %v947 = vadd.f32 %v852, %v926
    %v948 = vadd.f32 %v855, %v929
    %v949 = vadd.f32 %v858, %v932
    %v950 = vadd.f32 %v861, %v935
    %v951 = vadd.f32 %v864, %v938
    %v952 = vadd.f32 %v867, %v941
    %v953 = vadd.f32 %v870, %v944
    %954 = vrot.lane.b32.xlu0 %v644, 127
    %v955 = vpop.permute.xlu0 %954
    %956 = vrot.lane.b32.xlu0 %v645, 127
    %v957 = vpop.permute.xlu0 %956
    %958 = vrot.lane.b32.xlu0 %v646, 127
    %v959 = vpop.permute.xlu0 %958
    %960 = vrot.lane.b32.xlu0 %v647, 127
    %v961 = vpop.permute.xlu0 %960
    %962 = vrot.lane.b32.xlu0 %v648, 127
    %v963 = vpop.permute.xlu0 %962
    %964 = vrot.lane.b32.xlu0 %v649, 127
    %v965 = vpop.permute.xlu0 %964
    %966 = vrot.lane.b32.xlu0 %v650, 127
    %v967 = vpop.permute.xlu0 %966
    %968 = vrot.lane.b32.xlu0 %v651, 127
    %v969 = vpop.permute.xlu0 %968
    %v978 = vsel %vm63, %v955, 0.0
    %v979 = vsel %vm63, %v957, 0.0
    %v980 = vsel %vm63, %v959, 0.0
    %v981 = vsel %vm63, %v961, 0.0
    %v982 = vsel %vm63, %v963, 0.0
    %v983 = vsel %vm63, %v965, 0.0
    %v984 = vsel %vm63, %v967, 0.0
    %v985 = vsel %vm63, %v969, 0.0
    %s986 = scalar_lea.vmem %s3, 192
    %v987 = vld [vmem:[%s986] sm:$0xff]
    %v988 = vld [vmem:[%s986 + $0x8] sm:$0xff]
    %v989 = vld [vmem:[%s986 + $0x10] sm:$0xff]
    %v990 = vld [vmem:[%s986 + $0x18] sm:$0xff]
    %v991 = vld [vmem:[%s986 + $0x20] sm:$0xff]
    %v992 = vld [vmem:[%s986 + $0x28] sm:$0xff]
    %v993 = vld [vmem:[%s986 + $0x30] sm:$0xff]
    %v994 = vld [vmem:[%s986 + $0x38] sm:$0xff]
    %v996 = vsel %vm741, %v987, 0
    %v999 = vsel %vm741, %v988, 0
    %v1002 = vsel %vm741, %v989, 0
    %v1005 = vsel %vm741, %v990, 0
    %v1008 = vsel %vm741, %v991, 0
    %v1011 = vsel %vm741, %v992, 0
    %v1014 = vsel %vm741, %v993, 0
    %v1017 = vsel %vm741, %v994, 0
    %1019 = vmatpush.msra.mxu0 0.0
    %1020 = vmatpush.msra.mxu0 0.0
    %1021 = vmatpush.msra.mxu0 0.0
    %1022 = vmatpush.msra.mxu0 0.0
    %1023 = vmatpush.msra.mxu0 0.0
    %1024 = vmatpush.msra.mxu0 0.0
    %1025 = vmatpush.msra.mxu0 0.0
    %1026 = vmatpush.msra.mxu0 0.0
    %1027 = vmatpush.msra.mxu0 %v985
    %1028 = vmatpush.msra.mxu0 %v984
    %1029 = vmatpush.msra.mxu0 %v983
    %1030 = vmatpush.msra.mxu0 %v982
    %1031 = vmatpush.msra.mxu0 %v981
    %1032 = vmatpush.msra.mxu0 %v980
    %1033 = vmatpush.msra.mxu0 %v979
    %1034 = vmatpush.msra.mxu0 %v978
    %1035 = vmatmul.f32.gmra.mxu0 %v996
    %v1036 = vpop.f32.mrf.mxu0
    %v1037 = vadd.f32 0.0, %v1036
    %1038 = vmatmul.f32.gmra.mxu0 %v999
    %v1039 = vpop.f32.mrf.mxu0
    %v1040 = vadd.f32 0.0, %v1039
    %1041 = vmatmul.f32.gmra.mxu0 %v1002
    %v1042 = vpop.f32.mrf.mxu0
    %v1043 = vadd.f32 0.0, %v1042
    %1044 = vmatmul.f32.gmra.mxu0 %v1005
    %v1045 = vpop.f32.mrf.mxu0
    %v1046 = vadd.f32 0.0, %v1045
    %1047 = vmatmul.f32.gmra.mxu0 %v1008
    %v1048 = vpop.f32.mrf.mxu0
    %v1049 = vadd.f32 0.0, %v1048
    %1050 = vmatmul.f32.gmra.mxu0 %v1011
    %v1051 = vpop.f32.mrf.mxu0
    %v1052 = vadd.f32 0.0, %v1051
    %1053 = vmatmul.f32.gmra.mxu0 %v1014
    %v1054 = vpop.f32.mrf.mxu0
    %v1055 = vadd.f32 0.0, %v1054
    %1056 = vmatmul.f32.gmra.mxu0 %v1017
    %v1057 = vpop.f32.mrf.mxu0
    %v1058 = vadd.f32 0.0, %v1057
    %1059 = vdwg.mxu0
    %v1060 = vadd.f32 %v946, %v1037
    %v1061 = vadd.f32 %v947, %v1040
    %v1062 = vadd.f32 %v948, %v1043
    %v1063 = vadd.f32 %v949, %v1046
    %v1064 = vadd.f32 %v950, %v1049
    %v1065 = vadd.f32 %v951, %v1052
    %v1066 = vadd.f32 %v952, %v1055
    %v1067 = vadd.f32 %v953, %v1058
    %1068 = vrot.lane.b32.xlu0 %v644, 126
    %v1069 = vpop.permute.xlu0 %1068
    %1070 = vrot.lane.b32.xlu0 %v645, 126
    %v1071 = vpop.permute.xlu0 %1070
    %1072 = vrot.lane.b32.xlu0 %v646, 126
    %v1073 = vpop.permute.xlu0 %1072
    %1074 = vrot.lane.b32.xlu0 %v647, 126
    %v1075 = vpop.permute.xlu0 %1074
    %1076 = vrot.lane.b32.xlu0 %v648, 126
    %v1077 = vpop.permute.xlu0 %1076
    %1078 = vrot.lane.b32.xlu0 %v649, 126
    %v1079 = vpop.permute.xlu0 %1078
    %1080 = vrot.lane.b32.xlu0 %v650, 126
    %v1081 = vpop.permute.xlu0 %1080
    %1082 = vrot.lane.b32.xlu0 %v651, 126
    %v1083 = vpop.permute.xlu0 %1082
    %v1092 = vsel %vm65, %v1069, 0.0
    %v1093 = vsel %vm65, %v1071, 0.0
    %v1094 = vsel %vm65, %v1073, 0.0
    %v1095 = vsel %vm65, %v1075, 0.0
    %v1096 = vsel %vm65, %v1077, 0.0
    %v1097 = vsel %vm65, %v1079, 0.0
    %v1098 = vsel %vm65, %v1081, 0.0
    %v1099 = vsel %vm65, %v1083, 0.0
    %s1100 = scalar_lea.vmem %s3, 256
    %v1101 = vld [vmem:[%s1100] sm:$0xff]
    %v1102 = vld [vmem:[%s1100 + $0x8] sm:$0xff]
    %v1103 = vld [vmem:[%s1100 + $0x10] sm:$0xff]
    %v1104 = vld [vmem:[%s1100 + $0x18] sm:$0xff]
    %v1105 = vld [vmem:[%s1100 + $0x20] sm:$0xff]
    %v1106 = vld [vmem:[%s1100 + $0x28] sm:$0xff]
    %v1107 = vld [vmem:[%s1100 + $0x30] sm:$0xff]
    %v1108 = vld [vmem:[%s1100 + $0x38] sm:$0xff]
    %v1110 = vsel %vm741, %v1101, 0
    %v1113 = vsel %vm741, %v1102, 0
    %v1116 = vsel %vm741, %v1103, 0
    %v1119 = vsel %vm741, %v1104, 0
    %v1122 = vsel %vm741, %v1105, 0
    %v1125 = vsel %vm741, %v1106, 0
    %v1128 = vsel %vm741, %v1107, 0
    %v1131 = vsel %vm741, %v1108, 0
    %1133 = vmatpush.msra.mxu0 0.0
    %1134 = vmatpush.msra.mxu0 0.0
    %1135 = vmatpush.msra.mxu0 0.0
    %1136 = vmatpush.msra.mxu0 0.0
    %1137 = vmatpush.msra.mxu0 0.0
    %1138 = vmatpush.msra.mxu0 0.0
    %1139 = vmatpush.msra.mxu0 0.0
    %1140 = vmatpush.msra.mxu0 0.0
    %1141 = vmatpush.msra.mxu0 %v1099
    %1142 = vmatpush.msra.mxu0 %v1098
    %1143 = vmatpush.msra.mxu0 %v1097
    %1144 = vmatpush.msra.mxu0 %v1096
    %1145 = vmatpush.msra.mxu0 %v1095
    %1146 = vmatpush.msra.mxu0 %v1094
    %1147 = vmatpush.msra.mxu0 %v1093
    %1148 = vmatpush.msra.mxu0 %v1092
    %1149 = vmatmul.f32.gmra.mxu0 %v1110
    %v1150 = vpop.f32.mrf.mxu0
    %v1151 = vadd.f32 0.0, %v1150
    %1152 = vmatmul.f32.gmra.mxu0 %v1113
    %v1153 = vpop.f32.mrf.mxu0
    %v1154 = vadd.f32 0.0, %v1153
    %1155 = vmatmul.f32.gmra.mxu0 %v1116
    %v1156 = vpop.f32.mrf.mxu0
    %v1157 = vadd.f32 0.0, %v1156
    %1158 = vmatmul.f32.gmra.mxu0 %v1119
    %v1159 = vpop.f32.mrf.mxu0
    %v1160 = vadd.f32 0.0, %v1159
    %1161 = vmatmul.f32.gmra.mxu0 %v1122
    %v1162 = vpop.f32.mrf.mxu0
    %v1163 = vadd.f32 0.0, %v1162
    %1164 = vmatmul.f32.gmra.mxu0 %v1125
    %v1165 = vpop.f32.mrf.mxu0
    %v1166 = vadd.f32 0.0, %v1165
    %1167 = vmatmul.f32.gmra.mxu0 %v1128
    %v1168 = vpop.f32.mrf.mxu0
    %v1169 = vadd.f32 0.0, %v1168
    %1170 = vmatmul.f32.gmra.mxu0 %v1131
    %v1171 = vpop.f32.mrf.mxu0
    %v1172 = vadd.f32 0.0, %v1171
    %1173 = vdwg.mxu0
    %v1174 = vadd.f32 %v1060, %v1151
    %v1175 = vadd.f32 %v1061, %v1154
    %v1176 = vadd.f32 %v1062, %v1157
    %v1177 = vadd.f32 %v1063, %v1160
    %v1178 = vadd.f32 %v1064, %v1163
    %v1179 = vadd.f32 %v1065, %v1166
    %v1180 = vadd.f32 %v1066, %v1169
    %v1181 = vadd.f32 %v1067, %v1172
    %v1182 = vld [vmem:[%s4] sm:$0xff]
    %v1183 = vld [vmem:[%s4 + $0x8] sm:$0xff]
    %v1184 = vld [vmem:[%s4 + $0x10] sm:$0xff]
    %v1185 = vld [vmem:[%s4 + $0x18] sm:$0xff]
    %v1186 = vld [vmem:[%s4 + $0x20] sm:$0xff]
    %v1187 = vld [vmem:[%s4 + $0x28] sm:$0xff]
    %v1188 = vld [vmem:[%s4 + $0x30] sm:$0xff]
    %v1189 = vld [vmem:[%s4 + $0x38] sm:$0xff]
    %1191 = vset.pattern.permute.xlu0 0
    %1192 = vperm.xlu0 %1191, %v1182
    %v1193 = vpop.permute.xlu0 %1192
    %1196 = vset.pattern.permute.xlu0 0
    %1197 = vperm.xlu0 %1196, %v1183
    %v1198 = vpop.permute.xlu0 %1197
    %1201 = vset.pattern.permute.xlu0 0
    %1202 = vperm.xlu0 %1201, %v1184
    %v1203 = vpop.permute.xlu0 %1202
    %1206 = vset.pattern.permute.xlu0 0
    %1207 = vperm.xlu0 %1206, %v1185
    %v1208 = vpop.permute.xlu0 %1207
    %1211 = vset.pattern.permute.xlu0 0
    %1212 = vperm.xlu0 %1211, %v1186
    %v1213 = vpop.permute.xlu0 %1212
    %1216 = vset.pattern.permute.xlu0 0
    %1217 = vperm.xlu0 %1216, %v1187
    %v1218 = vpop.permute.xlu0 %1217
    %1221 = vset.pattern.permute.xlu0 0
    %1222 = vperm.xlu0 %1221, %v1188
    %v1223 = vpop.permute.xlu0 %1222
    %1226 = vset.pattern.permute.xlu0 0
    %1227 = vperm.xlu0 %1226, %v1189
    %v1228 = vpop.permute.xlu0 %1227
    %v1230 = vadd.f32 %v1174, %v1193
    %v1231 = vadd.f32 %v1175, %v1198
    %v1232 = vadd.f32 %v1176, %v1203
    %v1233 = vadd.f32 %v1177, %v1208
    %v1234 = vadd.f32 %v1178, %v1213
    %v1235 = vadd.f32 %v1179, %v1218
    %v1236 = vadd.f32 %v1180, %v1223
    %v1237 = vadd.f32 %v1181, %v1228
    %vm1238 = vcmp.gt.f32.partialorder %v1230, 0.0
    %vm1239 = vcmp.gt.f32.partialorder %v1231, 0.0
    %vm1240 = vcmp.gt.f32.partialorder %v1232, 0.0
    %vm1241 = vcmp.gt.f32.partialorder %v1233, 0.0
    %vm1242 = vcmp.gt.f32.partialorder %v1234, 0.0
    %vm1243 = vcmp.gt.f32.partialorder %v1235, 0.0
    %vm1244 = vcmp.gt.f32.partialorder %v1236, 0.0
    %vm1245 = vcmp.gt.f32.partialorder %v1237, 0.0
    %v1246 = vmin.f32 %v1230, 0.0
    %v1247 = vmin.f32 %v1231, 0.0
    %v1248 = vmin.f32 %v1232, 0.0
    %v1249 = vmin.f32 %v1233, 0.0
    %v1250 = vmin.f32 %v1234, 0.0
    %v1251 = vmin.f32 %v1235, 0.0
    %v1252 = vmin.f32 %v1236, 0.0
    %v1253 = vmin.f32 %v1237, 0.0
    %v1254 = vmul.f32 %v1246, 1.442695
    %v1255 = vpow.pop %v1254
    %v1256 = vmul.f32 %v1247, 1.442695
    %v1257 = vpow.pop %v1256
    %v1258 = vmul.f32 %v1248, 1.442695
    %v1259 = vpow.pop %v1258
    %v1260 = vmul.f32 %v1249, 1.442695
    %v1261 = vpow.pop %v1260
    %v1262 = vmul.f32 %v1250, 1.442695
    %v1263 = vpow.pop %v1262
    %v1264 = vmul.f32 %v1251, 1.442695
    %v1265 = vpow.pop %v1264
    %v1266 = vmul.f32 %v1252, 1.442695
    %v1267 = vpow.pop %v1266
    %v1268 = vmul.f32 %v1253, 1.442695
    %v1269 = vpow.pop %v1268
    %v1270 = vsub.f32 %v1255, 1.0
    %v1271 = vsub.f32 %v1257, 1.0
    %v1272 = vsub.f32 %v1259, 1.0
    %v1273 = vsub.f32 %v1261, 1.0
    %v1274 = vsub.f32 %v1263, 1.0
    %v1275 = vsub.f32 %v1265, 1.0
    %v1276 = vsub.f32 %v1267, 1.0
    %v1277 = vsub.f32 %v1269, 1.0
    %v1278 = vsel %vm1238, %v1230, %v1270
    %v1279 = vsel %vm1239, %v1231, %v1271
    %v1280 = vsel %vm1240, %v1232, %v1272
    %v1281 = vsel %vm1241, %v1233, %v1273
    %v1282 = vsel %vm1242, %v1234, %v1274
    %v1283 = vsel %vm1243, %v1235, %v1275
    %v1284 = vsel %vm1244, %v1236, %v1276
    %v1285 = vsel %vm1245, %v1237, %v1277
    %v1286 = vld [vmem:[%s5] sm:$0x3]
    %v1287 = vld [vmem:[%s6] sm:$0x3]
    %1289 = vset.pattern.permute.xlu0 0
    %1290 = vperm.xlu0 %1289, %v1287
    %v1291 = vpop.permute.xlu0 %1290
    %v1294 = vsel %vm741, %v1286, 0
    %1296 = vmatpush.msra.mxu0 0.0
    %1297 = vmatpush.msra.mxu0 0.0
    %1298 = vmatpush.msra.mxu0 0.0
    %1299 = vmatpush.msra.mxu0 0.0
    %1300 = vmatpush.msra.mxu0 0.0
    %1301 = vmatpush.msra.mxu0 0.0
    %1302 = vmatpush.msra.mxu0 0.0
    %1303 = vmatpush.msra.mxu0 0.0
    %1304 = vmatpush.msra.mxu0 %v1285
    %1305 = vmatpush.msra.mxu0 %v1284
    %1306 = vmatpush.msra.mxu0 %v1283
    %1307 = vmatpush.msra.mxu0 %v1282
    %1308 = vmatpush.msra.mxu0 %v1281
    %1309 = vmatpush.msra.mxu0 %v1280
    %1310 = vmatpush.msra.mxu0 %v1279
    %1311 = vmatpush.msra.mxu0 %v1278
    %1312 = vmatmul.f32.gmra.mxu0 %v1294
    %v1313 = vpop.f32.mrf.mxu0
    %v1314 = vadd.f32 %v1291, %v1313
    %1315 = vdwg.mxu0
    %vm1316 = vcmp.gt.f32.partialorder %v1314, 0.0
    %v1317 = vmin.f32 %v1314, 0.0
    %v1318 = vmul.f32 %v1317, 1.442695
    %v1319 = vpow.pop %v1318
    %v1320 = vsub.f32 %v1319, 1.0
    %v1321 = vsel %vm1316, %v1314, %v1320
    %vm1322 = vcmask 254976
    %v1323 = vsel %vm1322, %v1321, 0.0
    %1324 = vadd.xlane.f32.xlu0 %v1323
    %v1325 = vpop.xlane.xlu0 %1324
    %v1326 = vrot.slane %v1325, 4
    %v1327 = vadd.f32 %v1325, %v1326
    %v1328 = vrot.slane %v1327, 2
    %v1329 = vadd.f32 %v1327, %v1328
    %v1330 = vrot.slane %v1329, 1
    %v1331 = vadd.f32 %v1329, %v1330
    %s1332 = vtos %v1331
    %v1333 = vmul.f32 %v1321, %v1321
    %v1334 = vsel %vm1322, %v1333, 0.0
    %1335 = vadd.xlane.f32.xlu0 %v1334
    %v1336 = vpop.xlane.xlu0 %1335
    %v1337 = vrot.slane %v1336, 4
    %v1338 = vadd.f32 %v1336, %v1337
    %v1339 = vrot.slane %v1338, 2
    %v1340 = vadd.f32 %v1338, %v1339
    %v1341 = vrot.slane %v1340, 1
    %v1342 = vadd.f32 %v1340, %v1341
    %s1343 = vtos %v1342
    %v1344 = vrcp.pop 64.0
    %v1345 = vmul.f32 64.0, %v1344
    %v1346 = vsub.f32 1.0, %v1345
    %v1347 = vmul.f32 %v1344, %v1346
    %v1348 = vadd.f32 %v1344, %v1347
    %vm1349 = vweird.f32 %v1344
    %v1350 = vsel %vm1349, %v1344, %v1348
    %s1351 = vtos %v1350
    %s1352 = smul.f32 %s1332, %s1351
    %s1353 = smul.f32 %s1352, 64.0
    %s1354 = smul.f32 %s1353, %s1352
    %s1355 = ssub.f32 %s1343, %s1354
    %v1356 = vrcp.pop 63.0
    %v1357 = vmul.f32 63.0, %v1356
    %v1358 = vsub.f32 1.0, %v1357
    %v1359 = vmul.f32 %v1356, %v1358
    %v1360 = vadd.f32 %v1356, %v1359
    %vm1361 = vweird.f32 %v1356
    %v1362 = vsel %vm1361, %v1356, %v1360
    %s1363 = vtos %v1362
    %s1364 = smul.f32 %s1355, %s1363
    %v1365 = vstv %s1364
    %v1366 = vrsqrt.pop %v1365
    %v1367 = vmul.f32 %v1366, %v1365
    %v1368 = vmul.f32 %v1367, %v1366
    %v1369 = vmul.f32 0.5, %v1368
    %v1370 = vsub.f32 1.5, %v1369
    %v1371 = vmul.f32 %v1366, %v1370
    %vm1372 = vweird.f32 %v1365
    %vm1373 = vweird.f32 %v1366
    %vm1374 = vmor %vm1372, %vm1373
    %v1375 = vsel %vm1374, %v1366, %v1371
    %s1376 = vtos %v1375
    %v1377 = vstv %s1352
    %v1378 = vsub.f32 %v1321, %v1377
    %v1379 = vstv %s1376
    %v1380 = vmul.f32 %v1378, %v1379
    %1381 = vst.msk [vmem:[#allocation2] sm:$0x3] %vm1322, %v1380
    // Predicated region
    $region30: #{tpu_custom_call.1} parent=1 // pred_check
      _
    $region31: #{tpu_custom_call.1} parent=1 // pred_check_branch
      %1383 = sbr.rel (0) target = $region33
    $region32: #{tpu_custom_call.1} parent=1 // pred_region
      %1385 = vsyncadd [#allocation3], 0
      %s1387 = sshll.u32 [#allocation2], 4
      %s1388 = int_to_ptr.vmem [resolvable:$true] %s1387
      %s1389 = sshll.u32 %s7, 4
      %s1390 = int_to_ptr.hbm [resolvable:$true] %s1389
      %1392 = dma.vmem_to_hbm [thread:$0]  %s1388, 32, %s1390, [#allocation3]
    $region33: #{tpu_custom_call.1} parent=1 // pred_fallthru
      _
    // Predicated region
    $region34: #{tpu_custom_call.1} parent=1 // pred_check
      _
    $region35: #{tpu_custom_call.1} parent=1 // pred_check_branch
      %1394 = sbr.rel (0) target = $region37
    $region36: #{tpu_custom_call.1} parent=1 // pred_region
      %1396 = dma.done [#allocation3], 32
    $region37: #{tpu_custom_call.1} parent=1 // pred_fallthru
      _
    %1397 = vsyncpa [#allocation3], 1

</llo_original>
